<compile_context>
chip_gen: v5e
topology: v5e:2x2
jax: 0.10.0
libtpu: 0.0.40
codegen_flags: <defaults>
</compile_context>

<pallas_src>
import functools

import jax
import jax.numpy as jnp
from jax import lax
from jax.experimental import pallas as pl
from jax.experimental.pallas import tpu as pltpu


def _attention_head_kernel(xq_ref, xkv_ref, w_ref, out_ref, attn_ref, *, head_dim):
    H = head_dim
    w = w_ref[...]                                        # (Ep, 3H), bias folded in

    # Fused QKV projection: one MXU matmul per x block instead of three
    # 1-lane-wide ones.  Bias rides in the ones-column of x (see wrapper).
    qkv_q = jnp.dot(xq_ref[...], w, preferred_element_type=jnp.float32)    # (tq, 3H)
    qkv_kv = jnp.dot(xkv_ref[...], w, preferred_element_type=jnp.float32)  # (S, 3H)

    q = qkv_q[:, 0:H]                                     # (tq, H)
    k = qkv_kv[:, H:2 * H]                                # (S, H)
    v = qkv_kv[:, 2 * H:3 * H]                            # (S, H)

    # scores = q @ k^T expressed as a contraction of the shared last dim, so
    # no explicit transpose/relayout of k is materialized.
    # NOTE: no 1/sqrt(head_dim) scale — the PyTorch module never applies it.
    s = lax.dot_general(q, k, (((1,), (1,)), ((), ())),
                        preferred_element_type=jnp.float32)                # (tq, S)

    # Numerically stable softmax; the per-row divide becomes one reciprocal
    # (EUP slot) + a broadcast multiply (VPU).
    m = jnp.max(s, axis=-1, keepdims=True)
    e = jnp.exp(s - m)
    denom = jnp.sum(e, axis=-1, keepdims=True)
    w_attn = e * pl.reciprocal(denom)                     # exact: keeps 1e-5 tolerance

    attn_ref[...] = w_attn                                                  # (tq, S)
    out_ref[...] = jnp.dot(w_attn, v, preferred_element_type=jnp.float32)   # (tq, H)


def attention_head(x, wq, bq, wk, bk, wv, bv):
    x = x.astype(jnp.float32)
    S, E = x.shape
    H = wq.shape[1]

    # Pad the contraction dim E up to a lane-aligned 128 multiple and append a
    # ones column so the bias is folded into the weight rows:
    #   [x | 1 | 0...] @ [[Wq Wk Wv]; [bq bk bv]; 0...] == x @ W + b   (exact)
    Ep = ((E + 1 + 127) // 128) * 128
    x_pad = jnp.zeros((S, Ep), jnp.float32).at[:, :E].set(x).at[:, E].set(1.0)

    w_fused = jnp.zeros((Ep, 3 * H), jnp.float32)
    w_fused = (w_fused.at[:E, 0:H].set(wq.astype(jnp.float32))
                       .at[:E, H:2 * H].set(wk.astype(jnp.float32))
                       .at[:E, 2 * H:3 * H].set(wv.astype(jnp.float32)))
    w_fused = (w_fused.at[E, 0:H].set(jnp.reshape(bq, (H,)).astype(jnp.float32))
                       .at[E, H:2 * H].set(jnp.reshape(bk, (H,)).astype(jnp.float32))
                       .at[E, 2 * H:3 * H].set(jnp.reshape(bv, (H,)).astype(jnp.float32)))

    # Query-tiled grid; the full-x block and the fused weight are resident
    # (constant index_map) across query tiles.
    tq = 128 if (S % 128 == 0) else S
    grid = (S // tq,)

    kernel = functools.partial(_attention_head_kernel, head_dim=H)
    out_shape = (
        jax.ShapeDtypeStruct((S, H), jnp.float32),   # attn_output
        jax.ShapeDtypeStruct((S, S), jnp.float32),   # attn_weights
    )
    return pl.pallas_call(
        kernel,
        out_shape=out_shape,
        grid=grid,
        in_specs=[
            pl.BlockSpec((tq, Ep), lambda i: (i, 0)),      # query-row tile of x
            pl.BlockSpec((S, Ep), lambda i: (0, 0)),       # full x (resident) for K/V
            pl.BlockSpec((Ep, 3 * H), lambda i: (0, 0)),   # fused QKV weight (resident)
        ],
        out_specs=(
            pl.BlockSpec((tq, H), lambda i: (i, 0)),       # attn_output tile
            pl.BlockSpec((tq, S), lambda i: (i, 0)),       # attn_weights tile (lane-dense)
        ),
        compiler_params=pltpu.CompilerParams(
            dimension_semantics=("parallel",),             # shard query tiles across TCs (v7x)
            vmem_limit_bytes=32 * 1024 * 1024,
        ),
    )(x_pad, x_pad, w_fused)


def _reference(x, wq, bq, wk, bk, wv, bv):
    q = x @ wq + bq
    k = x @ wk + bk
    v = x @ wv + bv
    s = q @ k.T                      # no scale — matches the PyTorch module
    w = jax.nn.softmax(s, axis=-1)
    return w @ v, w


if __name__ == "__main__":
    embed_dim = 10
    head_dim = 1
    seq = 256                        # multiple of 128 -> two query tiles

    key = jax.random.PRNGKey(0)
    kx, kq, kk, kv, kbq, kbk, kbv = jax.random.split(key, 7)

    # Deterministic synthetic parameters (torch Linear init range), stored
    # transposed as (E, H) for x @ W.
    bound = 1.0 / (embed_dim ** 0.5)
    wq = jax.random.uniform(kq, (embed_dim, head_dim), jnp.float32, -bound, bound)
    wk = jax.random.uniform(kk, (embed_dim, head_dim), jnp.float32, -bound, bound)
    wv = jax.random.uniform(kv, (embed_dim, head_dim), jnp.float32, -bound, bound)
    bq = jax.random.uniform(kbq, (1, head_dim), jnp.float32, -bound, bound)
    bk = jax.random.uniform(kbk, (1, head_dim), jnp.float32, -bound, bound)
    bv = jax.random.uniform(kbv, (1, head_dim), jnp.float32, -bound, bound)

    x = jax.random.normal(kx, (seq, embed_dim), jnp.float32)

    attn_out, attn_w = attention_head(x, wq, bq, wk, bk, wv, bv)
    jax.block_until_ready((attn_out, attn_w))

    ref_out, ref_w = _reference(x, wq, bq, wk, bk, wv, bv)
    assert attn_out.shape == (seq, head_dim)
    assert attn_w.shape == (seq, seq)
    assert jnp.allclose(attn_out, ref_out, atol=1e-5, rtol=1e-5)
    assert jnp.allclose(attn_w, ref_w, atol=1e-5, rtol=1e-5)

    print("KERNEL_OK")
</pallas_src>

<mosaic_0001>
module attributes {stable_mosaic.version = 11 : i64} {
  func.func @_attention_head_kernel(%arg0: i32, %arg1: memref<128x128xf32, #tpu.memory_space<vmem>>, %arg2: memref<256x128xf32, #tpu.memory_space<vmem>>, %arg3: memref<128x3xf32, #tpu.memory_space<vmem>>, %arg4: memref<128x1xf32, #tpu.memory_space<vmem>>, %arg5: memref<128x256xf32, #tpu.memory_space<vmem>>) attributes {dimension_semantics = [#tpu.dimension_semantics<parallel>], iteration_bounds = array<i64: 2>, scalar_prefetch = 0 : i64, scratch_operands = 0 : i64, tpu.core_type = #tpu.core_type<tc>, window_params = [{transform_indices = @transform_0, window_bounds = array<i64: 128, 128>}, {pipeline_mode = #tpu.pipeline_mode<synchronous>, transform_indices = @transform_1, window_bounds = array<i64: 256, 128>}, {pipeline_mode = #tpu.pipeline_mode<synchronous>, transform_indices = @transform_2, window_bounds = array<i64: 128, 3>}, {transform_indices = @transform_3, window_bounds = array<i64: 128, 1>}, {transform_indices = @transform_4, window_bounds = array<i64: 128, 256>}]} {
    %c0 = arith.constant 0 : index
    %c0_0 = arith.constant 0 : index
    %0 = vector.load %arg3[%c0, %c0_0] : memref<128x3xf32, #tpu.memory_space<vmem>>, vector<128x3xf32>
    %c0_1 = arith.constant 0 : index
    %c0_2 = arith.constant 0 : index
    %1 = vector.load %arg1[%c0_1, %c0_2] : memref<128x128xf32, #tpu.memory_space<vmem>>, vector<128x128xf32>
    %cst = arith.constant dense<0.000000e+00> : vector<128x3xf32>
    %2 = tpu.matmul %1, %0, %cst {dimension_numbers = #tpu.dot_dimension_numbers<[1], [0], [0], [1], [0, 0, 1, 1], [], []>} : vector<128x128xf32>, vector<128x3xf32>, vector<128x3xf32> -> vector<128x3xf32>
    %c0_3 = arith.constant 0 : index
    %c0_4 = arith.constant 0 : index
    %3 = vector.load %arg2[%c0_3, %c0_4] : memref<256x128xf32, #tpu.memory_space<vmem>>, vector<256x128xf32>
    %cst_5 = arith.constant dense<0.000000e+00> : vector<256x3xf32>
    %4 = tpu.matmul %3, %0, %cst_5 {dimension_numbers = #tpu.dot_dimension_numbers<[1], [0], [0], [1], [0, 0, 1, 1], [], []>} : vector<256x128xf32>, vector<128x3xf32>, vector<256x3xf32> -> vector<256x3xf32>
    %5 = vector.extract_strided_slice %2 {offsets = [0, 0], sizes = [128, 1], strides = [1, 1]} : vector<128x3xf32> to vector<128x1xf32>
    %6 = vector.extract_strided_slice %4 {offsets = [0, 1], sizes = [256, 1], strides = [1, 1]} : vector<256x3xf32> to vector<256x1xf32>
    %7 = vector.extract_strided_slice %4 {offsets = [0, 2], sizes = [256, 1], strides = [1, 1]} : vector<256x3xf32> to vector<256x1xf32>
    %cst_6 = arith.constant dense<0.000000e+00> : vector<128x256xf32>
    %8 = tpu.matmul %5, %6, %cst_6 {dimension_numbers = #tpu.dot_dimension_numbers<[1], [1], [0], [0], [0, 0, 1, 0], [], []>} : vector<128x1xf32>, vector<256x1xf32>, vector<128x256xf32> -> vector<128x256xf32>
    %cst_7 = arith.constant dense<0xFF800000> : vector<128xf32>
    %9 = vector.multi_reduction <maximumf>, %8, %cst_7 [1] : vector<128x256xf32> to vector<128xf32>
    %10 = vector.shape_cast %9 : vector<128xf32> to vector<128x1xf32>
    %11 = vector.broadcast %10 : vector<128x1xf32> to vector<128x256xf32>
    %12 = arith.subf %8, %11 : vector<128x256xf32>
    %13 = math.exp %12 : vector<128x256xf32>
    %cst_8 = arith.constant dense<0.000000e+00> : vector<128xf32>
    %14 = vector.multi_reduction <add>, %13, %cst_8 [1] : vector<128x256xf32> to vector<128xf32>
    %15 = vector.shape_cast %14 : vector<128xf32> to vector<128x1xf32>
    %16 = tpu.reciprocal %15 : vector<128x1xf32> -> vector<128x1xf32>
    %17 = vector.broadcast %16 : vector<128x1xf32> to vector<128x256xf32>
    %18 = arith.mulf %13, %17 : vector<128x256xf32>
    %c0_9 = arith.constant 0 : index
    %c0_10 = arith.constant 0 : index
    %19 = vector.load %arg5[%c0_9, %c0_10] : memref<128x256xf32, #tpu.memory_space<vmem>>, vector<128x256xf32>
    tpu.vector_store %arg5[%c0_9, %c0_10], %18 {strides = array<i32>} : memref<128x256xf32, #tpu.memory_space<vmem>>, vector<128x256xf32>,
    %cst_11 = arith.constant dense<0.000000e+00> : vector<128x1xf32>
    %20 = tpu.matmul %18, %7, %cst_11 {dimension_numbers = #tpu.dot_dimension_numbers<[1], [0], [0], [1], [0, 0, 1, 1], [], []>} : vector<128x256xf32>, vector<256x1xf32>, vector<128x1xf32> -> vector<128x1xf32>
    %c0_12 = arith.constant 0 : index
    %c0_13 = arith.constant 0 : index
    %21 = vector.load %arg4[%c0_12, %c0_13] : memref<128x1xf32, #tpu.memory_space<vmem>>, vector<128x1xf32>
    tpu.vector_store %arg4[%c0_12, %c0_13], %20 {strides = array<i32>} : memref<128x1xf32, #tpu.memory_space<vmem>>, vector<128x1xf32>,
    return
  }
  func.func @transform_0(%arg0: i32) -> (i32, i32) {
    %c0_i32 = arith.constant 0 : i32
    %c0_i32_0 = arith.constant 0 : i32
    return %arg0, %c0_i32 : i32, i32
  }
  func.func @transform_1(%arg0: i32) -> (i32, i32) {
    %c0_i32 = arith.constant 0 : i32
    %c0_i32_0 = arith.constant 0 : i32
    %c0_i32_1 = arith.constant 0 : i32
    return %c0_i32, %c0_i32_0 : i32, i32
  }
  func.func @transform_2(%arg0: i32) -> (i32, i32) {
    %c0_i32 = arith.constant 0 : i32
    %c0_i32_0 = arith.constant 0 : i32
    %c0_i32_1 = arith.constant 0 : i32
    return %c0_i32, %c0_i32_0 : i32, i32
  }
  func.func @transform_3(%arg0: i32) -> (i32, i32) {
    %c0_i32 = arith.constant 0 : i32
    %c0_i32_0 = arith.constant 0 : i32
    return %arg0, %c0_i32 : i32, i32
  }
  func.func @transform_4(%arg0: i32) -> (i32, i32) {
    %c0_i32 = arith.constant 0 : i32
    %c0_i32_0 = arith.constant 0 : i32
    return %arg0, %c0_i32 : i32, i32
  }
}

</mosaic_0001>

<llo_original>
// kernel: tpu_custom_call.1
$region0: #{tpu_custom_call.1}
  #allocation0 [shape = 'u32[]', space=smem, size = 0x4, offset = 0x4, fixed_abs, tag = 'smem constant byte address 0x4 - core index']
  #allocation1 [shape = 'u32[72,128]{1,0:T(1,128)}', space=vmem, size = 0x9000, scoped, tag = 'internal scratch']
  %s0 = inlined_call_operand.hbm [shape: f32[256,128], index: 0, kind: input, shape index: {}]
  %s1 = inlined_call_operand.hbm [shape: f32[256,128], index: 1, kind: input, shape index: {}]
  %s2 = inlined_call_operand.vmem [shape: f32[128,3], index: 2, kind: input, shape index: {}]
  %s3 = inlined_call_operand.vmem [shape: f32[256,1], index: 3, kind: output, shape index: {0}]
  %s4 = inlined_call_operand.hbm [shape: f32[256,256], index: 4, kind: output, shape index: {1}]
  %5 = xla_tuple %s3, %s4
  %s6 = sld [smem:[#allocation0]]
  $region61: #{tpu_custom_call.1} parent=0
    _
  %s8 = ssub.s32 1, %s6
  %s9 = scalar_select 0, %s8, %s6
  $region1: #{tpu_custom_call.1} parent=0
    #allocation2 [shape = 'u8[131072]{0}', space=vmem, size = 0x20000, scoped, tag = 'input window, operand 0']
    #allocation3 [shape = 's32[2]{0}', space=sflag, size = 0x8, scoped, tag = 'scoped memory for tpu_custom_call.1']
    #allocation4 [shape = 's32[2]{0}', space=sflag, size = 0x8, scoped, tag = 'scoped memory for tpu_custom_call.1']
    #allocation5 [shape = 'u8[131072]{0}', space=vmem, size = 0x20000, scoped, tag = 'input window, operand 1, single buffered']
    #allocation6 [shape = 's32[1]{0}', space=sflag, size = 0x4, scoped, tag = 'scoped memory for tpu_custom_call.1']
    #allocation7 [shape = 'u8[262144]{0}', space=vmem, size = 0x40000, scoped, tag = 'output window, operand 1']
    %10 = vsyncpa [#allocation3], 0
    %s11 = scalar_lea.sflag [#allocation3], 1
    %12 = vsyncpa %s11, 0
    %13 = vsyncpa [#allocation6], 0
    %14 = vsyncpa [#allocation4], 0
    %s15 = scalar_lea.sflag [#allocation4], 1
    %16 = vsyncpa %s15, 0
    loop: start=0, step=1, limit=4
    $region2: #{tpu_custom_call.1} parent=1 // loop_pre_header
      _
    $region3: #{tpu_custom_call.1} parent=1 // loop_header
      %s18 = sphi 0, %s22
      %p19 = scmp.ge.s32.totalorder %s18, 4
      %s28 = sphi 0, %s30
      %s31 = sphi 0, %s28
      %s32 = sphi 0, %s31
      %s48 = sphi 0, %s32
      %s52 = sphi 0, %s52
      %s54 = sphi 0, %s52
      %s55 = sphi 0, %s54
      %s69 = sphi 0, %s55
      %s73 = sphi 0, %s73
      %s75 = sphi 0, %s73
      %s76 = sphi 0, %s75
      %s90 = sphi 0, %s76
      %s96 = sphi 0, %s98
      %s99 = sphi 0, %s96
      %s100 = sphi 0, %s99
      %s116 = sphi 0, %s100
      %s122 = sphi 0, %s124
      %s125 = sphi 0, %s122
      %s126 = sphi 0, %s125
      %s142 = sphi 0, %s126
    $region4: #{tpu_custom_call.1} parent=1 // loop_header_branch
      %21 = sbr.rel (%p19) target = $region8
    $region5: #{tpu_custom_call.1} parent=1 // loop_body
      %s23 = ssub.s32 %s18, 1
      %s24 = ssub.s32 %s18, 2
      %s25 = sadd.s32 %s18, 1
      %s26 = ssub.s32 %s18, %s25
      %p27 = scmp.eq.s32.totalorder %s26, 0
      %s29 = sadd.s32 %s28, 1
      %s30 = scalar_select %p27, %s28, %s29
      %p33 = pneg %p27
      %p34 = scmp.eq.s32.totalorder %s18, 1
      %p35 = por %p33, %p34
      %p36 = scmp.ne.s32.totalorder %s28, %s31
      %p37 = scmp.eq.s32.totalorder %s18, 0
      %p38 = por %p36, %p37
      %p39 = scmp.ne.s32.totalorder %s28, %s31
      %p40 = scmp.eq.s32.totalorder %s23, 1
      %p41 = por %p39, %p40
      %p42 = scmp.ne.s32.totalorder %s31, %s32
      %p43 = scmp.eq.s32.totalorder %s23, 0
      %p44 = por %p42, %p43
      %p45 = scmp.ne.s32.totalorder %s31, %s32
      %p46 = scmp.eq.s32.totalorder %s24, 1
      %p47 = por %p45, %p46
      %p49 = scmp.ne.s32.totalorder %s32, %s48
      %p50 = scmp.eq.s32.totalorder %s24, 0
      %p51 = por %p49, %p50
      %s53 = sadd.s32 %s52, 1
      %p56 = scmp.eq.s32.totalorder %s18, 1
      %p57 = scmp.ne.s32.totalorder %s52, %s54
      %p58 = scmp.eq.s32.totalorder %s18, 0
      %p59 = por %p57, %p58
      %p60 = scmp.ne.s32.totalorder %s52, %s54
      %p61 = scmp.eq.s32.totalorder %s23, 1
      %p62 = por %p60, %p61
      %p63 = scmp.ne.s32.totalorder %s54, %s55
      %p64 = scmp.eq.s32.totalorder %s23, 0
      %p65 = por %p63, %p64
      %p66 = scmp.ne.s32.totalorder %s54, %s55
      %p67 = scmp.eq.s32.totalorder %s24, 1
      %p68 = por %p66, %p67
      %p70 = scmp.ne.s32.totalorder %s55, %s69
      %p71 = scmp.eq.s32.totalorder %s24, 0
      %p72 = por %p70, %p71
      %s74 = sadd.s32 %s73, 1
      %p77 = scmp.eq.s32.totalorder %s18, 1
      %p78 = scmp.ne.s32.totalorder %s73, %s75
      %p79 = scmp.eq.s32.totalorder %s18, 0
      %p80 = por %p78, %p79
      %p81 = scmp.ne.s32.totalorder %s73, %s75
      %p82 = scmp.eq.s32.totalorder %s23, 1
      %p83 = por %p81, %p82
      %p84 = scmp.ne.s32.totalorder %s75, %s76
      %p85 = scmp.eq.s32.totalorder %s23, 0
      %p86 = por %p84, %p85
      %p87 = scmp.ne.s32.totalorder %s75, %s76
      %p88 = scmp.eq.s32.totalorder %s24, 1
      %p89 = por %p87, %p88
      %p91 = scmp.ne.s32.totalorder %s76, %s90
      %p92 = scmp.eq.s32.totalorder %s24, 0
      %p93 = por %p91, %p92
      %s94 = ssub.s32 %s18, %s25
      %p95 = scmp.eq.s32.totalorder %s94, 0
      %s97 = sadd.s32 %s96, 1
      %s98 = scalar_select %p95, %s96, %s97
      %p101 = pneg %p95
      %p102 = scmp.eq.s32.totalorder %s18, 1
      %p103 = por %p101, %p102
      %p104 = scmp.ne.s32.totalorder %s96, %s99
      %p105 = scmp.eq.s32.totalorder %s18, 0
      %p106 = por %p104, %p105
      %p107 = scmp.ne.s32.totalorder %s96, %s99
      %p108 = scmp.eq.s32.totalorder %s23, 1
      %p109 = por %p107, %p108
      %p110 = scmp.ne.s32.totalorder %s99, %s100
      %p111 = scmp.eq.s32.totalorder %s23, 0
      %p112 = por %p110, %p111
      %p113 = scmp.ne.s32.totalorder %s99, %s100
      %p114 = scmp.eq.s32.totalorder %s24, 1
      %p115 = por %p113, %p114
      %p117 = scmp.ne.s32.totalorder %s100, %s116
      %p118 = scmp.eq.s32.totalorder %s24, 0
      %p119 = por %p117, %p118
      %s120 = ssub.s32 %s18, %s25
      %p121 = scmp.eq.s32.totalorder %s120, 0
      %s123 = sadd.s32 %s122, 1
      %s124 = scalar_select %p121, %s122, %s123
      %p127 = pneg %p121
      %p128 = scmp.eq.s32.totalorder %s18, 1
      %p129 = por %p127, %p128
      %p130 = scmp.ne.s32.totalorder %s122, %s125
      %p131 = scmp.eq.s32.totalorder %s18, 0
      %p132 = por %p130, %p131
      %p133 = scmp.ne.s32.totalorder %s122, %s125
      %p134 = scmp.eq.s32.totalorder %s23, 1
      %p135 = por %p133, %p134
      %p136 = scmp.ne.s32.totalorder %s125, %s126
      %p137 = scmp.eq.s32.totalorder %s23, 0
      %p138 = por %p136, %p137
      %p139 = scmp.ne.s32.totalorder %s125, %s126
      %p140 = scmp.eq.s32.totalorder %s24, 1
      %p141 = por %p139, %p140
      %p143 = scmp.ne.s32.totalorder %s126, %s142
      %p144 = scmp.eq.s32.totalorder %s24, 0
      %p145 = por %p143, %p144
      %p146 = scmp.le.s32.totalorder 1, %s18
      %p147 = scmp.lt.s32.totalorder %s18, 3
      %p148 = pnand %p146, %p147
      %p149 = pneg %p148
      // Predicated region
      $region9: #{tpu_custom_call.1} parent=5 // pred_check
        _
      $region10: #{tpu_custom_call.1} parent=5 // pred_check_branch
        %151 = sbr.rel (%p148) target = $region12
      $region11: #{tpu_custom_call.1} parent=5 // pred_region
        %s152 = ssub.s32 %s18, 1
        // Predicated region
        $region13: #{tpu_custom_call.1} parent=11 // pred_check
          %p153 = pneg %p65
        $region14: #{tpu_custom_call.1} parent=11 // pred_check_branch
          %155 = sbr.rel (%p153) target = $region16
        $region15: #{tpu_custom_call.1} parent=11 // pred_region
          %157 = vsyncadd [#allocation6], 0
          %s158 = sshll.u32 %s1, 4
          %s159 = int_to_ptr.hbm [resolvable:$true] %s158
          %s160 = sshll.u32 [#allocation5], 4
          %s161 = int_to_ptr.vmem [resolvable:$true] %s160
          %166 = dma.hbm_to_vmem [thread:$0]  %s159, 4096, %s161, [#allocation6], 128, 128, 8
        $region16: #{tpu_custom_call.1} parent=11 // pred_fallthru
          _
        // Predicated region
        $region17: #{tpu_custom_call.1} parent=11 // pred_check
          %p167 = pneg %p86
        $region18: #{tpu_custom_call.1} parent=11 // pred_check_branch
          %169 = sbr.rel (%p167) target = $region20
        $region19: #{tpu_custom_call.1} parent=11 // pred_region
          _
        $region20: #{tpu_custom_call.1} parent=11 // pred_fallthru
          _
      $region12: #{tpu_custom_call.1} parent=5 // pred_fallthru
        _
      %p170 = scmp.lt.s32.totalorder %s18, 2
      // Predicated region
      $region21: #{tpu_custom_call.1} parent=5 // pred_check
        %p171 = pneg %p170
      $region22: #{tpu_custom_call.1} parent=5 // pred_check_branch
        %173 = sbr.rel (%p171) target = $region24
      $region23: #{tpu_custom_call.1} parent=5 // pred_region
        // Predicated region
        $region25: #{tpu_custom_call.1} parent=23 // pred_check
          %p174 = pneg %p38
        $region26: #{tpu_custom_call.1} parent=23 // pred_check_branch
          %176 = sbr.rel (%p174) target = $region28
        $region27: #{tpu_custom_call.1} parent=23 // pred_region
          %s177 = sand.u32 %s28, 1
          %s178 = scalar_lea.sflag [#allocation3], %s177
          %s179 = sand.u32 %s28, 1
          %s180 = smul.addr %s179, 128
          %s181 = scalar_lea.vmem [#allocation2], %s180
          %s182 = smul.u32 16, %s18
          %184 = vsyncadd %s178, 0
          %s185 = smul.addr %s182, 8
          %s186 = scalar_lea.hbm %s0, %s185
          %s187 = sshll.u32 %s186, 4
          %s188 = int_to_ptr.hbm [resolvable:$true] %s187
          %s189 = sshll.u32 %s181, 4
          %s190 = int_to_ptr.vmem [resolvable:$true] %s189
          %195 = dma.hbm_to_vmem [thread:$0]  %s188, 2048, %s190, %s178, 128, 128, 8
        $region28: #{tpu_custom_call.1} parent=23 // pred_fallthru
          _
      $region24: #{tpu_custom_call.1} parent=5 // pred_fallthru
        _
      %p196 = scmp.le.s32.totalorder 1, %s18
      %p197 = scmp.lt.s32.totalorder %s18, 3
      %p198 = pnand %p196, %p197
      %p199 = pneg %p198
      // Predicated region
      $region29: #{tpu_custom_call.1} parent=5 // pred_check
        _
      $region30: #{tpu_custom_call.1} parent=5 // pred_check_branch
        %201 = sbr.rel (%p198) target = $region32
      $region31: #{tpu_custom_call.1} parent=5 // pred_region
        %s202 = ssub.s32 %s18, 1
        %s203 = sand.u32 %s31, 1
        %s204 = scalar_lea.sflag [#allocation3], %s203
        %s205 = sand.u32 %s31, 1
        %s206 = smul.addr %s205, 128
        %s207 = scalar_lea.vmem [#allocation2], %s206
        // Predicated region
        $region33: #{tpu_custom_call.1} parent=31 // pred_check
          %p208 = pneg %p44
        $region34: #{tpu_custom_call.1} parent=31 // pred_check_branch
          %210 = sbr.rel (%p208) target = $region36
        $region35: #{tpu_custom_call.1} parent=31 // pred_region
          %212 = dma.done %s204, 2048
        $region36: #{tpu_custom_call.1} parent=31 // pred_fallthru
          _
        // Predicated region
        $region37: #{tpu_custom_call.1} parent=31 // pred_check
          %p213 = pneg %p65
        $region38: #{tpu_custom_call.1} parent=31 // pred_check_branch
          %215 = sbr.rel (%p213) target = $region40
        $region39: #{tpu_custom_call.1} parent=31 // pred_region
          %217 = dma.done [#allocation6], 4096
        $region40: #{tpu_custom_call.1} parent=31 // pred_fallthru
          _
        %s218 = sand.u32 %s31, 1
        %s219 = scalar_lea.sflag [#allocation3], %s218
        %s220 = sand.u32 %s31, 1
        %s221 = smul.addr %s220, 128
        %s222 = scalar_lea.vmem [#allocation2], %s221
        %p223 = pneg %p44
        %p224 = pneg %p41
        %p225 = pneg %p65
        %p226 = pneg %p62
        %p227 = pneg %p86
        %p228 = pneg %p83
        %p229 = pneg %p112
        %p230 = pneg %p109
        %s231 = smul.u32 16, %s23
        %p232 = scmp.lt.s32.totalorder %s231, 31
        %s233 = scalar_select %p232, %s231, 31
        %s234 = smul.addr %s233, 8
        %s235 = scalar_lea.vmem %s3, %s234
        %p236 = pneg %p138
        %p237 = pneg %p135
        %s238 = sand.u32 %s125, 1
        %s239 = scalar_lea.sflag [#allocation4], %s238
        %s240 = sand.u32 %s125, 1
        %s241 = smul.addr %s240, 256
        %s242 = scalar_lea.vmem [#allocation7], %s241
        %s243 = smul.u32 16, %s23
        %s244 = smul.u32 16, %s23
        %p245 = scmp.lt.s32.totalorder %s244, 31
        %s246 = scalar_select %p245, %s244, 31
        %s247 = smul.addr %s246, 8
        %s248 = scalar_lea.vmem %s3, %s247
        %s249 = smul.u32 16, %s23
        %s250 = smul.u32 16, %s23
        %v251 = vld [vmem:[%s2] sm:$0xff]
        %v252 = vld [vmem:[%s2 + $0x8] sm:$0xff]
        %v253 = vld [vmem:[%s2 + $0x10] sm:$0xff]
        %v254 = vld [vmem:[%s2 + $0x18] sm:$0xff]
        %v255 = vld [vmem:[%s2 + $0x20] sm:$0xff]
        %v256 = vld [vmem:[%s2 + $0x28] sm:$0xff]
        %v257 = vld [vmem:[%s2 + $0x30] sm:$0xff]
        %v258 = vld [vmem:[%s2 + $0x38] sm:$0xff]
        %v259 = vld [vmem:[%s2 + $0x40] sm:$0xff]
        %v260 = vld [vmem:[%s2 + $0x48] sm:$0xff]
        %v261 = vld [vmem:[%s2 + $0x50] sm:$0xff]
        %v262 = vld [vmem:[%s2 + $0x58] sm:$0xff]
        %v263 = vld [vmem:[%s2 + $0x60] sm:$0xff]
        %v264 = vld [vmem:[%s2 + $0x68] sm:$0xff]
        %v265 = vld [vmem:[%s2 + $0x70] sm:$0xff]
        %v266 = vld [vmem:[%s2 + $0x78] sm:$0xff]
        %v267 = vld [vmem:[%s207] sm:$0xff]
        %v268 = vld [vmem:[%s207 + $0x8] sm:$0xff]
        %v269 = vld [vmem:[%s207 + $0x10] sm:$0xff]
        %v270 = vld [vmem:[%s207 + $0x18] sm:$0xff]
        %v271 = vld [vmem:[%s207 + $0x20] sm:$0xff]
        %v272 = vld [vmem:[%s207 + $0x28] sm:$0xff]
        %v273 = vld [vmem:[%s207 + $0x30] sm:$0xff]
        %v274 = vld [vmem:[%s207 + $0x38] sm:$0xff]
        %v275 = vld [vmem:[%s207 + $0x40] sm:$0xff]
        %v276 = vld [vmem:[%s207 + $0x48] sm:$0xff]
        %v277 = vld [vmem:[%s207 + $0x50] sm:$0xff]
        %v278 = vld [vmem:[%s207 + $0x58] sm:$0xff]
        %v279 = vld [vmem:[%s207 + $0x60] sm:$0xff]
        %v280 = vld [vmem:[%s207 + $0x68] sm:$0xff]
        %v281 = vld [vmem:[%s207 + $0x70] sm:$0xff]
        %v282 = vld [vmem:[%s207 + $0x78] sm:$0xff]
        %283 = vmatpush.msra.mxu0 %v266
        %284 = vmatpush.msra.mxu0 %v265
        %285 = vmatpush.msra.mxu0 %v264
        %286 = vmatpush.msra.mxu0 %v263
        %287 = vmatpush.msra.mxu0 %v262
        %288 = vmatpush.msra.mxu0 %v261
        %289 = vmatpush.msra.mxu0 %v260
        %290 = vmatpush.msra.mxu0 %v259
        %291 = vmatpush.msra.mxu0 %v258
        %292 = vmatpush.msra.mxu0 %v257
        %293 = vmatpush.msra.mxu0 %v256
        %294 = vmatpush.msra.mxu0 %v255
        %295 = vmatpush.msra.mxu0 %v254
        %296 = vmatpush.msra.mxu0 %v253
        %297 = vmatpush.msra.mxu0 %v252
        %298 = vmatpush.msra.mxu0 %v251
        %299 = vmatmul.f32.gmra.mxu0 %v267
        %v300 = vpop.f32.mrf.mxu0
        %v301 = vadd.f32 0.0, %v300
        %302 = vmatmul.f32.gmra.mxu0 %v268
        %v303 = vpop.f32.mrf.mxu0
        %v304 = vadd.f32 0.0, %v303
        %305 = vmatmul.f32.gmra.mxu0 %v269
        %v306 = vpop.f32.mrf.mxu0
        %v307 = vadd.f32 0.0, %v306
        %308 = vmatmul.f32.gmra.mxu0 %v270
        %v309 = vpop.f32.mrf.mxu0
        %v310 = vadd.f32 0.0, %v309
        %311 = vmatmul.f32.gmra.mxu0 %v271
        %v312 = vpop.f32.mrf.mxu0
        %v313 = vadd.f32 0.0, %v312
        %314 = vmatmul.f32.gmra.mxu0 %v272
        %v315 = vpop.f32.mrf.mxu0
        %v316 = vadd.f32 0.0, %v315
        %317 = vmatmul.f32.gmra.mxu0 %v273
        %v318 = vpop.f32.mrf.mxu0
        %v319 = vadd.f32 0.0, %v318
        %320 = vmatmul.f32.gmra.mxu0 %v274
        %v321 = vpop.f32.mrf.mxu0
        %v322 = vadd.f32 0.0, %v321
        %323 = vmatmul.f32.gmra.mxu0 %v275
        %v324 = vpop.f32.mrf.mxu0
        %v325 = vadd.f32 0.0, %v324
        %326 = vmatmul.f32.gmra.mxu0 %v276
        %v327 = vpop.f32.mrf.mxu0
        %v328 = vadd.f32 0.0, %v327
        %329 = vmatmul.f32.gmra.mxu0 %v277
        %v330 = vpop.f32.mrf.mxu0
        %v331 = vadd.f32 0.0, %v330
        %332 = vmatmul.f32.gmra.mxu0 %v278
        %v333 = vpop.f32.mrf.mxu0
        %v334 = vadd.f32 0.0, %v333
        %335 = vmatmul.f32.gmra.mxu0 %v279
        %v336 = vpop.f32.mrf.mxu0
        %v337 = vadd.f32 0.0, %v336
        %338 = vmatmul.f32.gmra.mxu0 %v280
        %v339 = vpop.f32.mrf.mxu0
        %v340 = vadd.f32 0.0, %v339
        %341 = vmatmul.f32.gmra.mxu0 %v281
        %v342 = vpop.f32.mrf.mxu0
        %v343 = vadd.f32 0.0, %v342
        %344 = vmatmul.f32.gmra.mxu0 %v282
        %v345 = vpop.f32.mrf.mxu0
        %v346 = vadd.f32 0.0, %v345
        %347 = vdwg.mxu0
        %v348 = vld [vmem:[#allocation5] sm:$0xff]
        %v349 = vld [vmem:[#allocation5 + $0x8] sm:$0xff]
        %v350 = vld [vmem:[#allocation5 + $0x10] sm:$0xff]
        %v351 = vld [vmem:[#allocation5 + $0x18] sm:$0xff]
        %v352 = vld [vmem:[#allocation5 + $0x20] sm:$0xff]
        %v353 = vld [vmem:[#allocation5 + $0x28] sm:$0xff]
        %v354 = vld [vmem:[#allocation5 + $0x30] sm:$0xff]
        %v355 = vld [vmem:[#allocation5 + $0x38] sm:$0xff]
        %v356 = vld [vmem:[#allocation5 + $0x40] sm:$0xff]
        %v357 = vld [vmem:[#allocation5 + $0x48] sm:$0xff]
        %v358 = vld [vmem:[#allocation5 + $0x50] sm:$0xff]
        %v359 = vld [vmem:[#allocation5 + $0x58] sm:$0xff]
        %v360 = vld [vmem:[#allocation5 + $0x60] sm:$0xff]
        %v361 = vld [vmem:[#allocation5 + $0x68] sm:$0xff]
        %v362 = vld [vmem:[#allocation5 + $0x70] sm:$0xff]
        %v363 = vld [vmem:[#allocation5 + $0x78] sm:$0xff]
        %v364 = vld [vmem:[#allocation5 + $0x80] sm:$0xff]
        %v365 = vld [vmem:[#allocation5 + $0x88] sm:$0xff]
        %v366 = vld [vmem:[#allocation5 + $0x90] sm:$0xff]
        %v367 = vld [vmem:[#allocation5 + $0x98] sm:$0xff]
        %v368 = vld [vmem:[#allocation5 + $0xa0] sm:$0xff]
        %v369 = vld [vmem:[#allocation5 + $0xa8] sm:$0xff]
        %v370 = vld [vmem:[#allocation5 + $0xb0] sm:$0xff]
        %v371 = vld [vmem:[#allocation5 + $0xb8] sm:$0xff]
        %v372 = vld [vmem:[#allocation5 + $0xc0] sm:$0xff]
        %v373 = vld [vmem:[#allocation5 + $0xc8] sm:$0xff]
        %v374 = vld [vmem:[#allocation5 + $0xd0] sm:$0xff]
        %v375 = vld [vmem:[#allocation5 + $0xd8] sm:$0xff]
        %v376 = vld [vmem:[#allocation5 + $0xe0] sm:$0xff]
        %v377 = vld [vmem:[#allocation5 + $0xe8] sm:$0xff]
        %v378 = vld [vmem:[#allocation5 + $0xf0] sm:$0xff]
        %v379 = vld [vmem:[#allocation5 + $0xf8] sm:$0xff]
        %380 = vmatpush.msra.mxu0 %v266
        %381 = vmatpush.msra.mxu0 %v265
        %382 = vmatpush.msra.mxu0 %v264
        %383 = vmatpush.msra.mxu0 %v263
        %384 = vmatpush.msra.mxu0 %v262
        %385 = vmatpush.msra.mxu0 %v261
        %386 = vmatpush.msra.mxu0 %v260
        %387 = vmatpush.msra.mxu0 %v259
        %388 = vmatpush.msra.mxu0 %v258
        %389 = vmatpush.msra.mxu0 %v257
        %390 = vmatpush.msra.mxu0 %v256
        %391 = vmatpush.msra.mxu0 %v255
        %392 = vmatpush.msra.mxu0 %v254
        %393 = vmatpush.msra.mxu0 %v253
        %394 = vmatpush.msra.mxu0 %v252
        %395 = vmatpush.msra.mxu0 %v251
        %396 = vmatmul.f32.gmra.mxu0 %v348
        %v397 = vpop.f32.mrf.mxu0
        %v398 = vadd.f32 0.0, %v397
        %399 = vmatmul.f32.gmra.mxu0 %v349
        %v400 = vpop.f32.mrf.mxu0
        %v401 = vadd.f32 0.0, %v400
        %402 = vmatmul.f32.gmra.mxu0 %v350
        %v403 = vpop.f32.mrf.mxu0
        %v404 = vadd.f32 0.0, %v403
        %405 = vmatmul.f32.gmra.mxu0 %v351
        %v406 = vpop.f32.mrf.mxu0
        %v407 = vadd.f32 0.0, %v406
        %408 = vmatmul.f32.gmra.mxu0 %v352
        %v409 = vpop.f32.mrf.mxu0
        %v410 = vadd.f32 0.0, %v409
        %411 = vmatmul.f32.gmra.mxu0 %v353
        %v412 = vpop.f32.mrf.mxu0
        %v413 = vadd.f32 0.0, %v412
        %414 = vmatmul.f32.gmra.mxu0 %v354
        %v415 = vpop.f32.mrf.mxu0
        %v416 = vadd.f32 0.0, %v415
        %417 = vmatmul.f32.gmra.mxu0 %v355
        %v418 = vpop.f32.mrf.mxu0
        %v419 = vadd.f32 0.0, %v418
        %420 = vmatmul.f32.gmra.mxu0 %v356
        %v421 = vpop.f32.mrf.mxu0
        %v422 = vadd.f32 0.0, %v421
        %423 = vmatmul.f32.gmra.mxu0 %v357
        %v424 = vpop.f32.mrf.mxu0
        %v425 = vadd.f32 0.0, %v424
        %426 = vmatmul.f32.gmra.mxu0 %v358
        %v427 = vpop.f32.mrf.mxu0
        %v428 = vadd.f32 0.0, %v427
        %429 = vmatmul.f32.gmra.mxu0 %v359
        %v430 = vpop.f32.mrf.mxu0
        %v431 = vadd.f32 0.0, %v430
        %432 = vmatmul.f32.gmra.mxu0 %v360
        %v433 = vpop.f32.mrf.mxu0
        %v434 = vadd.f32 0.0, %v433
        %435 = vmatmul.f32.gmra.mxu0 %v361
        %v436 = vpop.f32.mrf.mxu0
        %v437 = vadd.f32 0.0, %v436
        %438 = vmatmul.f32.gmra.mxu0 %v362
        %v439 = vpop.f32.mrf.mxu0
        %v440 = vadd.f32 0.0, %v439
        %441 = vmatmul.f32.gmra.mxu0 %v363
        %v442 = vpop.f32.mrf.mxu0
        %v443 = vadd.f32 0.0, %v442
        %444 = vmatmul.f32.gmra.mxu0 %v364
        %v445 = vpop.f32.mrf.mxu0
        %v446 = vadd.f32 0.0, %v445
        %447 = vmatmul.f32.gmra.mxu0 %v365
        %v448 = vpop.f32.mrf.mxu0
        %v449 = vadd.f32 0.0, %v448
        %450 = vmatmul.f32.gmra.mxu0 %v366
        %v451 = vpop.f32.mrf.mxu0
        %v452 = vadd.f32 0.0, %v451
        %453 = vmatmul.f32.gmra.mxu0 %v367
        %v454 = vpop.f32.mrf.mxu0
        %v455 = vadd.f32 0.0, %v454
        %456 = vmatmul.f32.gmra.mxu0 %v368
        %v457 = vpop.f32.mrf.mxu0
        %v458 = vadd.f32 0.0, %v457
        %459 = vmatmul.f32.gmra.mxu0 %v369
        %v460 = vpop.f32.mrf.mxu0
        %v461 = vadd.f32 0.0, %v460
        %462 = vmatmul.f32.gmra.mxu0 %v370
        %v463 = vpop.f32.mrf.mxu0
        %v464 = vadd.f32 0.0, %v463
        %465 = vmatmul.f32.gmra.mxu0 %v371
        %v466 = vpop.f32.mrf.mxu0
        %v467 = vadd.f32 0.0, %v466
        %468 = vmatmul.f32.gmra.mxu0 %v372
        %v469 = vpop.f32.mrf.mxu0
        %v470 = vadd.f32 0.0, %v469
        %471 = vmatmul.f32.gmra.mxu0 %v373
        %v472 = vpop.f32.mrf.mxu0
        %v473 = vadd.f32 0.0, %v472
        %474 = vmatmul.f32.gmra.mxu0 %v374
        %v475 = vpop.f32.mrf.mxu0
        %v476 = vadd.f32 0.0, %v475
        %477 = vmatmul.f32.gmra.mxu0 %v375
        %v478 = vpop.f32.mrf.mxu0
        %v479 = vadd.f32 0.0, %v478
        %480 = vmatmul.f32.gmra.mxu0 %v376
        %v481 = vpop.f32.mrf.mxu0
        %v482 = vadd.f32 0.0, %v481
        %483 = vmatmul.f32.gmra.mxu0 %v377
        %v484 = vpop.f32.mrf.mxu0
        %v485 = vadd.f32 0.0, %v484
        %486 = vmatmul.f32.gmra.mxu0 %v378
        %v487 = vpop.f32.mrf.mxu0
        %v488 = vadd.f32 0.0, %v487
        %489 = vmatmul.f32.gmra.mxu0 %v379
        %v490 = vpop.f32.mrf.mxu0
        %v491 = vadd.f32 0.0, %v490
        %492 = vdwg.mxu0
        %525 = vrot.lane.b32.xlu0 %v398, 127
        %v526 = vpop.permute.xlu0 %525
        %527 = vrot.lane.b32.xlu0 %v401, 127
        %v528 = vpop.permute.xlu0 %527
        %529 = vrot.lane.b32.xlu0 %v404, 127
        %v530 = vpop.permute.xlu0 %529
        %531 = vrot.lane.b32.xlu0 %v407, 127
        %v532 = vpop.permute.xlu0 %531
        %533 = vrot.lane.b32.xlu0 %v410, 127
        %v534 = vpop.permute.xlu0 %533
        %535 = vrot.lane.b32.xlu0 %v413, 127
        %v536 = vpop.permute.xlu0 %535
        %537 = vrot.lane.b32.xlu0 %v416, 127
        %v538 = vpop.permute.xlu0 %537
        %539 = vrot.lane.b32.xlu0 %v419, 127
        %v540 = vpop.permute.xlu0 %539
        %541 = vrot.lane.b32.xlu0 %v422, 127
        %v542 = vpop.permute.xlu0 %541
        %543 = vrot.lane.b32.xlu0 %v425, 127
        %v544 = vpop.permute.xlu0 %543
        %545 = vrot.lane.b32.xlu0 %v428, 127
        %v546 = vpop.permute.xlu0 %545
        %547 = vrot.lane.b32.xlu0 %v431, 127
        %v548 = vpop.permute.xlu0 %547
        %549 = vrot.lane.b32.xlu0 %v434, 127
        %v550 = vpop.permute.xlu0 %549
        %551 = vrot.lane.b32.xlu0 %v437, 127
        %v552 = vpop.permute.xlu0 %551
        %553 = vrot.lane.b32.xlu0 %v440, 127
        %v554 = vpop.permute.xlu0 %553
        %555 = vrot.lane.b32.xlu0 %v443, 127
        %v556 = vpop.permute.xlu0 %555
        %557 = vrot.lane.b32.xlu0 %v446, 127
        %v558 = vpop.permute.xlu0 %557
        %559 = vrot.lane.b32.xlu0 %v449, 127
        %v560 = vpop.permute.xlu0 %559
        %561 = vrot.lane.b32.xlu0 %v452, 127
        %v562 = vpop.permute.xlu0 %561
        %563 = vrot.lane.b32.xlu0 %v455, 127
        %v564 = vpop.permute.xlu0 %563
        %565 = vrot.lane.b32.xlu0 %v458, 127
        %v566 = vpop.permute.xlu0 %565
        %567 = vrot.lane.b32.xlu0 %v461, 127
        %v568 = vpop.permute.xlu0 %567
        %569 = vrot.lane.b32.xlu0 %v464, 127
        %v570 = vpop.permute.xlu0 %569
        %571 = vrot.lane.b32.xlu0 %v467, 127
        %v572 = vpop.permute.xlu0 %571
        %573 = vrot.lane.b32.xlu0 %v470, 127
        %v574 = vpop.permute.xlu0 %573
        %575 = vrot.lane.b32.xlu0 %v473, 127
        %v576 = vpop.permute.xlu0 %575
        %577 = vrot.lane.b32.xlu0 %v476, 127
        %v578 = vpop.permute.xlu0 %577
        %579 = vrot.lane.b32.xlu0 %v479, 127
        %v580 = vpop.permute.xlu0 %579
        %581 = vrot.lane.b32.xlu0 %v482, 127
        %v582 = vpop.permute.xlu0 %581
        %583 = vrot.lane.b32.xlu0 %v485, 127
        %v584 = vpop.permute.xlu0 %583
        %585 = vrot.lane.b32.xlu0 %v488, 127
        %v586 = vpop.permute.xlu0 %585
        %587 = vrot.lane.b32.xlu0 %v491, 127
        %v588 = vpop.permute.xlu0 %587
        %vm589 = vcmask 7168
        %v591 = vsel %vm589, %v301, 0
        %v594 = vsel %vm589, %v304, 0
        %v597 = vsel %vm589, %v307, 0
        %v600 = vsel %vm589, %v310, 0
        %v603 = vsel %vm589, %v313, 0
        %v606 = vsel %vm589, %v316, 0
        %v609 = vsel %vm589, %v319, 0
        %v612 = vsel %vm589, %v322, 0
        %v615 = vsel %vm589, %v325, 0
        %v618 = vsel %vm589, %v328, 0
        %v621 = vsel %vm589, %v331, 0
        %v624 = vsel %vm589, %v334, 0
        %v627 = vsel %vm589, %v337, 0
        %v630 = vsel %vm589, %v340, 0
        %v633 = vsel %vm589, %v343, 0
        %v636 = vsel %vm589, %v346, 0
        %v638 = vsel %vm589, %v526, 0
        %v640 = vsel %vm589, %v528, 0
        %v642 = vsel %vm589, %v530, 0
        %v644 = vsel %vm589, %v532, 0
        %v646 = vsel %vm589, %v534, 0
        %v648 = vsel %vm589, %v536, 0
        %v650 = vsel %vm589, %v538, 0
        %v652 = vsel %vm589, %v540, 0
        %v654 = vsel %vm589, %v542, 0
        %v656 = vsel %vm589, %v544, 0
        %v658 = vsel %vm589, %v546, 0
        %v660 = vsel %vm589, %v548, 0
        %v662 = vsel %vm589, %v550, 0
        %v664 = vsel %vm589, %v552, 0
        %v666 = vsel %vm589, %v554, 0
        %v668 = vsel %vm589, %v556, 0
        %v670 = vsel %vm589, %v558, 0
        %v672 = vsel %vm589, %v560, 0
        %v674 = vsel %vm589, %v562, 0
        %v676 = vsel %vm589, %v564, 0
        %v678 = vsel %vm589, %v566, 0
        %v680 = vsel %vm589, %v568, 0
        %v682 = vsel %vm589, %v570, 0
        %v684 = vsel %vm589, %v572, 0
        %v686 = vsel %vm589, %v574, 0
        %v688 = vsel %vm589, %v576, 0
        %v690 = vsel %vm589, %v578, 0
        %v692 = vsel %vm589, %v580, 0
        %v694 = vsel %vm589, %v582, 0
        %v696 = vsel %vm589, %v584, 0
        %v698 = vsel %vm589, %v586, 0
        %v700 = vsel %vm589, %v588, 0
        %702 = vmatpush.xpose.msra.mxu0 %v668
        %703 = vmatpush.xpose.msra.mxu0 %v666
        %704 = vmatpush.xpose.msra.mxu0 %v664
        %705 = vmatpush.xpose.msra.mxu0 %v662
        %706 = vmatpush.xpose.msra.mxu0 %v660
        %707 = vmatpush.xpose.msra.mxu0 %v658
        %708 = vmatpush.xpose.msra.mxu0 %v656
        %709 = vmatpush.xpose.msra.mxu0 %v654
        %710 = vmatpush.xpose.msra.mxu0 %v652
        %711 = vmatpush.xpose.msra.mxu0 %v650
        %712 = vmatpush.xpose.msra.mxu0 %v648
        %713 = vmatpush.xpose.msra.mxu0 %v646
        %714 = vmatpush.xpose.msra.mxu0 %v644
        %715 = vmatpush.xpose.msra.mxu0 %v642
        %716 = vmatpush.xpose.msra.mxu0 %v640
        %717 = vmatpush.xpose.msra.mxu0 %v638
        %718 = vmatmul.f32.gmra.mxu0 %v591
        %v719 = vpop.f32.mrf.mxu0
        %v720 = vadd.f32 0.0, %v719
        %721 = vmatmul.f32.gmra.mxu0 %v594
        %v722 = vpop.f32.mrf.mxu0
        %v723 = vadd.f32 0.0, %v722
        %724 = vmatmul.f32.gmra.mxu0 %v597
        %v725 = vpop.f32.mrf.mxu0
        %v726 = vadd.f32 0.0, %v725
        %727 = vmatmul.f32.gmra.mxu0 %v600
        %v728 = vpop.f32.mrf.mxu0
        %v729 = vadd.f32 0.0, %v728
        %730 = vmatmul.f32.gmra.mxu0 %v603
        %v731 = vpop.f32.mrf.mxu0
        %v732 = vadd.f32 0.0, %v731
        %733 = vmatmul.f32.gmra.mxu0 %v606
        %v734 = vpop.f32.mrf.mxu0
        %v735 = vadd.f32 0.0, %v734
        %736 = vmatmul.f32.gmra.mxu0 %v609
        %v737 = vpop.f32.mrf.mxu0
        %v738 = vadd.f32 0.0, %v737
        %739 = vmatmul.f32.gmra.mxu0 %v612
        %v740 = vpop.f32.mrf.mxu0
        %v741 = vadd.f32 0.0, %v740
        %742 = vmatmul.f32.gmra.mxu0 %v615
        %v743 = vpop.f32.mrf.mxu0
        %v744 = vadd.f32 0.0, %v743
        %745 = vmatmul.f32.gmra.mxu0 %v618
        %v746 = vpop.f32.mrf.mxu0
        %v747 = vadd.f32 0.0, %v746
        %748 = vmatmul.f32.gmra.mxu0 %v621
        %v749 = vpop.f32.mrf.mxu0
        %v750 = vadd.f32 0.0, %v749
        %751 = vmatmul.f32.gmra.mxu0 %v624
        %v752 = vpop.f32.mrf.mxu0
        %v753 = vadd.f32 0.0, %v752
        %754 = vmatmul.f32.gmra.mxu0 %v627
        %v755 = vpop.f32.mrf.mxu0
        %v756 = vadd.f32 0.0, %v755
        %757 = vmatmul.f32.gmra.mxu0 %v630
        %v758 = vpop.f32.mrf.mxu0
        %v759 = vadd.f32 0.0, %v758
        %760 = vmatmul.f32.gmra.mxu0 %v633
        %v761 = vpop.f32.mrf.mxu0
        %v762 = vadd.f32 0.0, %v761
        %763 = vmatmul.f32.gmra.mxu0 %v636
        %v764 = vpop.f32.mrf.mxu0
        %v765 = vadd.f32 0.0, %v764
        %766 = vdwg.mxu0
        %767 = vmatpush.xpose.msra.mxu0 %v700
        %768 = vmatpush.xpose.msra.mxu0 %v698
        %769 = vmatpush.xpose.msra.mxu0 %v696
        %770 = vmatpush.xpose.msra.mxu0 %v694
        %771 = vmatpush.xpose.msra.mxu0 %v692
        %772 = vmatpush.xpose.msra.mxu0 %v690
        %773 = vmatpush.xpose.msra.mxu0 %v688
        %774 = vmatpush.xpose.msra.mxu0 %v686
        %775 = vmatpush.xpose.msra.mxu0 %v684
        %776 = vmatpush.xpose.msra.mxu0 %v682
        %777 = vmatpush.xpose.msra.mxu0 %v680
        %778 = vmatpush.xpose.msra.mxu0 %v678
        %779 = vmatpush.xpose.msra.mxu0 %v676
        %780 = vmatpush.xpose.msra.mxu0 %v674
        %781 = vmatpush.xpose.msra.mxu0 %v672
        %782 = vmatpush.xpose.msra.mxu0 %v670
        %783 = vmatmul.f32.gmra.mxu0 %v591
        %v784 = vpop.f32.mrf.mxu0
        %v785 = vadd.f32 0.0, %v784
        %786 = vmatmul.f32.gmra.mxu0 %v594
        %v787 = vpop.f32.mrf.mxu0
        %v788 = vadd.f32 0.0, %v787
        %789 = vmatmul.f32.gmra.mxu0 %v597
        %v790 = vpop.f32.mrf.mxu0
        %v791 = vadd.f32 0.0, %v790
        %792 = vmatmul.f32.gmra.mxu0 %v600
        %v793 = vpop.f32.mrf.mxu0
        %v794 = vadd.f32 0.0, %v793
        %795 = vmatmul.f32.gmra.mxu0 %v603
        %v796 = vpop.f32.mrf.mxu0
        %v797 = vadd.f32 0.0, %v796
        %798 = vmatmul.f32.gmra.mxu0 %v606
        %v799 = vpop.f32.mrf.mxu0
        %v800 = vadd.f32 0.0, %v799
        %801 = vmatmul.f32.gmra.mxu0 %v609
        %v802 = vpop.f32.mrf.mxu0
        %v803 = vadd.f32 0.0, %v802
        %804 = vmatmul.f32.gmra.mxu0 %v612
        %v805 = vpop.f32.mrf.mxu0
        %v806 = vadd.f32 0.0, %v805
        %807 = vmatmul.f32.gmra.mxu0 %v615
        %v808 = vpop.f32.mrf.mxu0
        %v809 = vadd.f32 0.0, %v808
        %810 = vmatmul.f32.gmra.mxu0 %v618
        %v811 = vpop.f32.mrf.mxu0
        %v812 = vadd.f32 0.0, %v811
        %813 = vmatmul.f32.gmra.mxu0 %v621
        %v814 = vpop.f32.mrf.mxu0
        %v815 = vadd.f32 0.0, %v814
        %816 = vmatmul.f32.gmra.mxu0 %v624
        %v817 = vpop.f32.mrf.mxu0
        %v818 = vadd.f32 0.0, %v817
        %819 = vmatmul.f32.gmra.mxu0 %v627
        %v820 = vpop.f32.mrf.mxu0
        %v821 = vadd.f32 0.0, %v820
        %822 = vmatmul.f32.gmra.mxu0 %v630
        %v823 = vpop.f32.mrf.mxu0
        %v824 = vadd.f32 0.0, %v823
        %825 = vmatmul.f32.gmra.mxu0 %v633
        %v826 = vpop.f32.mrf.mxu0
        %v827 = vadd.f32 0.0, %v826
        %828 = vmatmul.f32.gmra.mxu0 %v636
        %v829 = vpop.f32.mrf.mxu0
        %v830 = vadd.f32 0.0, %v829
        %831 = vdwg.mxu0
        %v832 = vmax.f32 %v720, %v785
        %833 = vmax.xlane.f32.xlu0 %v832
        %v834 = vpop.xlane.xlu0 %833
        %v835 = vmax.f32 %v723, %v788
        %836 = vmax.xlane.f32.xlu0 %v835
        %v837 = vpop.xlane.xlu0 %836
        %v838 = vmax.f32 %v726, %v791
        %839 = vmax.xlane.f32.xlu0 %v838
        %v840 = vpop.xlane.xlu0 %839
        %v841 = vmax.f32 %v729, %v794
        %842 = vmax.xlane.f32.xlu0 %v841
        %v843 = vpop.xlane.xlu0 %842
        %v844 = vmax.f32 %v732, %v797
        %845 = vmax.xlane.f32.xlu0 %v844
        %v846 = vpop.xlane.xlu0 %845
        %v847 = vmax.f32 %v735, %v800
        %848 = vmax.xlane.f32.xlu0 %v847
        %v849 = vpop.xlane.xlu0 %848
        %v850 = vmax.f32 %v738, %v803
        %851 = vmax.xlane.f32.xlu0 %v850
        %v852 = vpop.xlane.xlu0 %851
        %v853 = vmax.f32 %v741, %v806
        %854 = vmax.xlane.f32.xlu0 %v853
        %v855 = vpop.xlane.xlu0 %854
        %v856 = vmax.f32 %v744, %v809
        %857 = vmax.xlane.f32.xlu0 %v856
        %v858 = vpop.xlane.xlu0 %857
        %v859 = vmax.f32 %v747, %v812
        %860 = vmax.xlane.f32.xlu0 %v859
        %v861 = vpop.xlane.xlu0 %860
        %v862 = vmax.f32 %v750, %v815
        %863 = vmax.xlane.f32.xlu0 %v862
        %v864 = vpop.xlane.xlu0 %863
        %v865 = vmax.f32 %v753, %v818
        %866 = vmax.xlane.f32.xlu0 %v865
        %v867 = vpop.xlane.xlu0 %866
        %v868 = vmax.f32 %v756, %v821
        %869 = vmax.xlane.f32.xlu0 %v868
        %v870 = vpop.xlane.xlu0 %869
        %v871 = vmax.f32 %v759, %v824
        %872 = vmax.xlane.f32.xlu0 %v871
        %v873 = vpop.xlane.xlu0 %872
        %v874 = vmax.f32 %v762, %v827
        %875 = vmax.xlane.f32.xlu0 %v874
        %v876 = vpop.xlane.xlu0 %875
        %v877 = vmax.f32 %v765, %v830
        %878 = vmax.xlane.f32.xlu0 %v877
        %v879 = vpop.xlane.xlu0 %878
        %v880 = vsub.f32 %v720, %v834
        %v881 = vsub.f32 %v785, %v834
        %v882 = vsub.f32 %v723, %v837
        %v883 = vsub.f32 %v788, %v837
        %v884 = vsub.f32 %v726, %v840
        %v885 = vsub.f32 %v791, %v840
        %v886 = vsub.f32 %v729, %v843
        %v887 = vsub.f32 %v794, %v843
        %v888 = vsub.f32 %v732, %v846
        %v889 = vsub.f32 %v797, %v846
        %v890 = vsub.f32 %v735, %v849
        %v891 = vsub.f32 %v800, %v849
        %v892 = vsub.f32 %v738, %v852
        %v893 = vsub.f32 %v803, %v852
        %v894 = vsub.f32 %v741, %v855
        %v895 = vsub.f32 %v806, %v855
        %v896 = vsub.f32 %v744, %v858
        %v897 = vsub.f32 %v809, %v858
        %v898 = vsub.f32 %v747, %v861
        %v899 = vsub.f32 %v812, %v861
        %v900 = vsub.f32 %v750, %v864
        %v901 = vsub.f32 %v815, %v864
        %v902 = vsub.f32 %v753, %v867
        %v903 = vsub.f32 %v818, %v867
        %v904 = vsub.f32 %v756, %v870
        %v905 = vsub.f32 %v821, %v870
        %v906 = vsub.f32 %v759, %v873
        %v907 = vsub.f32 %v824, %v873
        %v908 = vsub.f32 %v762, %v876
        %v909 = vsub.f32 %v827, %v876
        %v910 = vsub.f32 %v765, %v879
        %v911 = vsub.f32 %v830, %v879
        %v912 = vmul.f32 %v880, 1.442695
        %v913 = vpow.pop %v912
        %v914 = vmul.f32 %v881, 1.442695
        %v915 = vpow.pop %v914
        %v916 = vmul.f32 %v882, 1.442695
        %v917 = vpow.pop %v916
        %v918 = vmul.f32 %v883, 1.442695
        %v919 = vpow.pop %v918
        %v920 = vmul.f32 %v884, 1.442695
        %v921 = vpow.pop %v920
        %v922 = vmul.f32 %v885, 1.442695
        %v923 = vpow.pop %v922
        %v924 = vmul.f32 %v886, 1.442695
        %v925 = vpow.pop %v924
        %v926 = vmul.f32 %v887, 1.442695
        %v927 = vpow.pop %v926
        %v928 = vmul.f32 %v888, 1.442695
        %v929 = vpow.pop %v928
        %v930 = vmul.f32 %v889, 1.442695
        %v931 = vpow.pop %v930
        %v932 = vmul.f32 %v890, 1.442695
        %v933 = vpow.pop %v932
        %v934 = vmul.f32 %v891, 1.442695
        %v935 = vpow.pop %v934
        %v936 = vmul.f32 %v892, 1.442695
        %v937 = vpow.pop %v936
        %v938 = vmul.f32 %v893, 1.442695
        %v939 = vpow.pop %v938
        %v940 = vmul.f32 %v894, 1.442695
        %v941 = vpow.pop %v940
        %v942 = vmul.f32 %v895, 1.442695
        %v943 = vpow.pop %v942
        %v944 = vmul.f32 %v896, 1.442695
        %v945 = vpow.pop %v944
        %v946 = vmul.f32 %v897, 1.442695
        %v947 = vpow.pop %v946
        %v948 = vmul.f32 %v898, 1.442695
        %v949 = vpow.pop %v948
        %v950 = vmul.f32 %v899, 1.442695
        %v951 = vpow.pop %v950
        %v952 = vmul.f32 %v900, 1.442695
        %v953 = vpow.pop %v952
        %v954 = vmul.f32 %v901, 1.442695
        %v955 = vpow.pop %v954
        %v956 = vmul.f32 %v902, 1.442695
        %v957 = vpow.pop %v956
        %v958 = vmul.f32 %v903, 1.442695
        %v959 = vpow.pop %v958
        %v960 = vmul.f32 %v904, 1.442695
        %v961 = vpow.pop %v960
        %v962 = vmul.f32 %v905, 1.442695
        %v963 = vpow.pop %v962
        %v964 = vmul.f32 %v906, 1.442695
        %v965 = vpow.pop %v964
        %v966 = vmul.f32 %v907, 1.442695
        %v967 = vpow.pop %v966
        %v968 = vmul.f32 %v908, 1.442695
        %v969 = vpow.pop %v968
        %v970 = vmul.f32 %v909, 1.442695
        %v971 = vpow.pop %v970
        %v972 = vmul.f32 %v910, 1.442695
        %v973 = vpow.pop %v972
        %v974 = vmul.f32 %v911, 1.442695
        %v975 = vpow.pop %v974
        %v976 = vadd.f32 %v913, %v915
        %977 = vadd.xlane.f32.xlu0 %v976
        %v978 = vpop.xlane.xlu0 %977
        %v979 = vadd.f32 %v917, %v919
        %980 = vadd.xlane.f32.xlu0 %v979
        %v981 = vpop.xlane.xlu0 %980
        %v982 = vadd.f32 %v921, %v923
        %983 = vadd.xlane.f32.xlu0 %v982
        %v984 = vpop.xlane.xlu0 %983
        %v985 = vadd.f32 %v925, %v927
        %986 = vadd.xlane.f32.xlu0 %v985
        %v987 = vpop.xlane.xlu0 %986
        %v988 = vadd.f32 %v929, %v931
        %989 = vadd.xlane.f32.xlu0 %v988
        %v990 = vpop.xlane.xlu0 %989
        %v991 = vadd.f32 %v933, %v935
        %992 = vadd.xlane.f32.xlu0 %v991
        %v993 = vpop.xlane.xlu0 %992
        %v994 = vadd.f32 %v937, %v939
        %995 = vadd.xlane.f32.xlu0 %v994
        %v996 = vpop.xlane.xlu0 %995
        %v997 = vadd.f32 %v941, %v943
        %998 = vadd.xlane.f32.xlu0 %v997
        %v999 = vpop.xlane.xlu0 %998
        %v1000 = vadd.f32 %v945, %v947
        %1001 = vadd.xlane.f32.xlu0 %v1000
        %v1002 = vpop.xlane.xlu0 %1001
        %v1003 = vadd.f32 %v949, %v951
        %1004 = vadd.xlane.f32.xlu0 %v1003
        %v1005 = vpop.xlane.xlu0 %1004
        %v1006 = vadd.f32 %v953, %v955
        %1007 = vadd.xlane.f32.xlu0 %v1006
        %v1008 = vpop.xlane.xlu0 %1007
        %v1009 = vadd.f32 %v957, %v959
        %1010 = vadd.xlane.f32.xlu0 %v1009
        %v1011 = vpop.xlane.xlu0 %1010
        %v1012 = vadd.f32 %v961, %v963
        %1013 = vadd.xlane.f32.xlu0 %v1012
        %v1014 = vpop.xlane.xlu0 %1013
        %v1015 = vadd.f32 %v965, %v967
        %1016 = vadd.xlane.f32.xlu0 %v1015
        %v1017 = vpop.xlane.xlu0 %1016
        %v1018 = vadd.f32 %v969, %v971
        %1019 = vadd.xlane.f32.xlu0 %v1018
        %v1020 = vpop.xlane.xlu0 %1019
        %v1021 = vadd.f32 %v973, %v975
        %1022 = vadd.xlane.f32.xlu0 %v1021
        %v1023 = vpop.xlane.xlu0 %1022
        %v1024 = vrcp.pop %v978
        %v1025 = vmul.f32 %v978, %v1024
        %v1026 = vsub.f32 1.0, %v1025
        %v1027 = vmul.f32 %v1024, %v1026
        %v1028 = vadd.f32 %v1024, %v1027
        %vm1029 = vweird.f32 %v978
        %vm1030 = vweird.f32 %v1024
        %vm1031 = vmor %vm1029, %vm1030
        %v1032 = vsel %vm1031, %v1024, %v1028
        %v1033 = vand.u32 2147483647, %v978
        %vm1034 = vcmp.eq.f32.partialorder %v1033, 8.507059e+37
        %v1035 = vand.u32 %v978, 2147483648
        %v1036 = vor.u32 1.1754944e-38, %v1035
        %v1037 = vsel %vm1034, %v1036, %v1032
        %v1038 = vrcp.pop %v981
        %v1039 = vmul.f32 %v981, %v1038
        %v1040 = vsub.f32 1.0, %v1039
        %v1041 = vmul.f32 %v1038, %v1040
        %v1042 = vadd.f32 %v1038, %v1041
        %vm1043 = vweird.f32 %v981
        %vm1044 = vweird.f32 %v1038
        %vm1045 = vmor %vm1043, %vm1044
        %v1046 = vsel %vm1045, %v1038, %v1042
        %v1047 = vand.u32 2147483647, %v981
        %vm1048 = vcmp.eq.f32.partialorder %v1047, 8.507059e+37
        %v1049 = vand.u32 %v981, 2147483648
        %v1050 = vor.u32 1.1754944e-38, %v1049
        %v1051 = vsel %vm1048, %v1050, %v1046
        %v1052 = vrcp.pop %v984
        %v1053 = vmul.f32 %v984, %v1052
        %v1054 = vsub.f32 1.0, %v1053
        %v1055 = vmul.f32 %v1052, %v1054
        %v1056 = vadd.f32 %v1052, %v1055
        %vm1057 = vweird.f32 %v984
        %vm1058 = vweird.f32 %v1052
        %vm1059 = vmor %vm1057, %vm1058
        %v1060 = vsel %vm1059, %v1052, %v1056
        %v1061 = vand.u32 2147483647, %v984
        %vm1062 = vcmp.eq.f32.partialorder %v1061, 8.507059e+37
        %v1063 = vand.u32 %v984, 2147483648
        %v1064 = vor.u32 1.1754944e-38, %v1063
        %v1065 = vsel %vm1062, %v1064, %v1060
        %v1066 = vrcp.pop %v987
        %v1067 = vmul.f32 %v987, %v1066
        %v1068 = vsub.f32 1.0, %v1067
        %v1069 = vmul.f32 %v1066, %v1068
        %v1070 = vadd.f32 %v1066, %v1069
        %vm1071 = vweird.f32 %v987
        %vm1072 = vweird.f32 %v1066
        %vm1073 = vmor %vm1071, %vm1072
        %v1074 = vsel %vm1073, %v1066, %v1070
        %v1075 = vand.u32 2147483647, %v987
        %vm1076 = vcmp.eq.f32.partialorder %v1075, 8.507059e+37
        %v1077 = vand.u32 %v987, 2147483648
        %v1078 = vor.u32 1.1754944e-38, %v1077
        %v1079 = vsel %vm1076, %v1078, %v1074
        %v1080 = vrcp.pop %v990
        %v1081 = vmul.f32 %v990, %v1080
        %v1082 = vsub.f32 1.0, %v1081
        %v1083 = vmul.f32 %v1080, %v1082
        %v1084 = vadd.f32 %v1080, %v1083
        %vm1085 = vweird.f32 %v990
        %vm1086 = vweird.f32 %v1080
        %vm1087 = vmor %vm1085, %vm1086
        %v1088 = vsel %vm1087, %v1080, %v1084
        %v1089 = vand.u32 2147483647, %v990
        %vm1090 = vcmp.eq.f32.partialorder %v1089, 8.507059e+37
        %v1091 = vand.u32 %v990, 2147483648
        %v1092 = vor.u32 1.1754944e-38, %v1091
        %v1093 = vsel %vm1090, %v1092, %v1088
        %v1094 = vrcp.pop %v993
        %v1095 = vmul.f32 %v993, %v1094
        %v1096 = vsub.f32 1.0, %v1095
        %v1097 = vmul.f32 %v1094, %v1096
        %v1098 = vadd.f32 %v1094, %v1097
        %vm1099 = vweird.f32 %v993
        %vm1100 = vweird.f32 %v1094
        %vm1101 = vmor %vm1099, %vm1100
        %v1102 = vsel %vm1101, %v1094, %v1098
        %v1103 = vand.u32 2147483647, %v993
        %vm1104 = vcmp.eq.f32.partialorder %v1103, 8.507059e+37
        %v1105 = vand.u32 %v993, 2147483648
        %v1106 = vor.u32 1.1754944e-38, %v1105
        %v1107 = vsel %vm1104, %v1106, %v1102
        %v1108 = vrcp.pop %v996
        %v1109 = vmul.f32 %v996, %v1108
        %v1110 = vsub.f32 1.0, %v1109
        %v1111 = vmul.f32 %v1108, %v1110
        %v1112 = vadd.f32 %v1108, %v1111
        %vm1113 = vweird.f32 %v996
        %vm1114 = vweird.f32 %v1108
        %vm1115 = vmor %vm1113, %vm1114
        %v1116 = vsel %vm1115, %v1108, %v1112
        %v1117 = vand.u32 2147483647, %v996
        %vm1118 = vcmp.eq.f32.partialorder %v1117, 8.507059e+37
        %v1119 = vand.u32 %v996, 2147483648
        %v1120 = vor.u32 1.1754944e-38, %v1119
        %v1121 = vsel %vm1118, %v1120, %v1116
        %v1122 = vrcp.pop %v999
        %v1123 = vmul.f32 %v999, %v1122
        %v1124 = vsub.f32 1.0, %v1123
        %v1125 = vmul.f32 %v1122, %v1124
        %v1126 = vadd.f32 %v1122, %v1125
        %vm1127 = vweird.f32 %v999
        %vm1128 = vweird.f32 %v1122
        %vm1129 = vmor %vm1127, %vm1128
        %v1130 = vsel %vm1129, %v1122, %v1126
        %v1131 = vand.u32 2147483647, %v999
        %vm1132 = vcmp.eq.f32.partialorder %v1131, 8.507059e+37
        %v1133 = vand.u32 %v999, 2147483648
        %v1134 = vor.u32 1.1754944e-38, %v1133
        %v1135 = vsel %vm1132, %v1134, %v1130
        %v1136 = vrcp.pop %v1002
        %v1137 = vmul.f32 %v1002, %v1136
        %v1138 = vsub.f32 1.0, %v1137
        %v1139 = vmul.f32 %v1136, %v1138
        %v1140 = vadd.f32 %v1136, %v1139
        %vm1141 = vweird.f32 %v1002
        %vm1142 = vweird.f32 %v1136
        %vm1143 = vmor %vm1141, %vm1142
        %v1144 = vsel %vm1143, %v1136, %v1140
        %v1145 = vand.u32 2147483647, %v1002
        %vm1146 = vcmp.eq.f32.partialorder %v1145, 8.507059e+37
        %v1147 = vand.u32 %v1002, 2147483648
        %v1148 = vor.u32 1.1754944e-38, %v1147
        %v1149 = vsel %vm1146, %v1148, %v1144
        %v1150 = vrcp.pop %v1005
        %v1151 = vmul.f32 %v1005, %v1150
        %v1152 = vsub.f32 1.0, %v1151
        %v1153 = vmul.f32 %v1150, %v1152
        %v1154 = vadd.f32 %v1150, %v1153
        %vm1155 = vweird.f32 %v1005
        %vm1156 = vweird.f32 %v1150
        %vm1157 = vmor %vm1155, %vm1156
        %v1158 = vsel %vm1157, %v1150, %v1154
        %v1159 = vand.u32 2147483647, %v1005
        %vm1160 = vcmp.eq.f32.partialorder %v1159, 8.507059e+37
        %v1161 = vand.u32 %v1005, 2147483648
        %v1162 = vor.u32 1.1754944e-38, %v1161
        %v1163 = vsel %vm1160, %v1162, %v1158
        %v1164 = vrcp.pop %v1008
        %v1165 = vmul.f32 %v1008, %v1164
        %v1166 = vsub.f32 1.0, %v1165
        %v1167 = vmul.f32 %v1164, %v1166
        %v1168 = vadd.f32 %v1164, %v1167
        %vm1169 = vweird.f32 %v1008
        %vm1170 = vweird.f32 %v1164
        %vm1171 = vmor %vm1169, %vm1170
        %v1172 = vsel %vm1171, %v1164, %v1168
        %v1173 = vand.u32 2147483647, %v1008
        %vm1174 = vcmp.eq.f32.partialorder %v1173, 8.507059e+37
        %v1175 = vand.u32 %v1008, 2147483648
        %v1176 = vor.u32 1.1754944e-38, %v1175
        %v1177 = vsel %vm1174, %v1176, %v1172
        %v1178 = vrcp.pop %v1011
        %v1179 = vmul.f32 %v1011, %v1178
        %v1180 = vsub.f32 1.0, %v1179
        %v1181 = vmul.f32 %v1178, %v1180
        %v1182 = vadd.f32 %v1178, %v1181
        %vm1183 = vweird.f32 %v1011
        %vm1184 = vweird.f32 %v1178
        %vm1185 = vmor %vm1183, %vm1184
        %v1186 = vsel %vm1185, %v1178, %v1182
        %v1187 = vand.u32 2147483647, %v1011
        %vm1188 = vcmp.eq.f32.partialorder %v1187, 8.507059e+37
        %v1189 = vand.u32 %v1011, 2147483648
        %v1190 = vor.u32 1.1754944e-38, %v1189
        %v1191 = vsel %vm1188, %v1190, %v1186
        %v1192 = vrcp.pop %v1014
        %v1193 = vmul.f32 %v1014, %v1192
        %v1194 = vsub.f32 1.0, %v1193
        %v1195 = vmul.f32 %v1192, %v1194
        %v1196 = vadd.f32 %v1192, %v1195
        %vm1197 = vweird.f32 %v1014
        %vm1198 = vweird.f32 %v1192
        %vm1199 = vmor %vm1197, %vm1198
        %v1200 = vsel %vm1199, %v1192, %v1196
        %v1201 = vand.u32 2147483647, %v1014
        %vm1202 = vcmp.eq.f32.partialorder %v1201, 8.507059e+37
        %v1203 = vand.u32 %v1014, 2147483648
        %v1204 = vor.u32 1.1754944e-38, %v1203
        %v1205 = vsel %vm1202, %v1204, %v1200
        %v1206 = vrcp.pop %v1017
        %v1207 = vmul.f32 %v1017, %v1206
        %v1208 = vsub.f32 1.0, %v1207
        %v1209 = vmul.f32 %v1206, %v1208
        %v1210 = vadd.f32 %v1206, %v1209
        %vm1211 = vweird.f32 %v1017
        %vm1212 = vweird.f32 %v1206
        %vm1213 = vmor %vm1211, %vm1212
        %v1214 = vsel %vm1213, %v1206, %v1210
        %v1215 = vand.u32 2147483647, %v1017
        %vm1216 = vcmp.eq.f32.partialorder %v1215, 8.507059e+37
        %v1217 = vand.u32 %v1017, 2147483648
        %v1218 = vor.u32 1.1754944e-38, %v1217
        %v1219 = vsel %vm1216, %v1218, %v1214
        %v1220 = vrcp.pop %v1020
        %v1221 = vmul.f32 %v1020, %v1220
        %v1222 = vsub.f32 1.0, %v1221
        %v1223 = vmul.f32 %v1220, %v1222
        %v1224 = vadd.f32 %v1220, %v1223
        %vm1225 = vweird.f32 %v1020
        %vm1226 = vweird.f32 %v1220
        %vm1227 = vmor %vm1225, %vm1226
        %v1228 = vsel %vm1227, %v1220, %v1224
        %v1229 = vand.u32 2147483647, %v1020
        %vm1230 = vcmp.eq.f32.partialorder %v1229, 8.507059e+37
        %v1231 = vand.u32 %v1020, 2147483648
        %v1232 = vor.u32 1.1754944e-38, %v1231
        %v1233 = vsel %vm1230, %v1232, %v1228
        %v1234 = vrcp.pop %v1023
        %v1235 = vmul.f32 %v1023, %v1234
        %v1236 = vsub.f32 1.0, %v1235
        %v1237 = vmul.f32 %v1234, %v1236
        %v1238 = vadd.f32 %v1234, %v1237
        %vm1239 = vweird.f32 %v1023
        %vm1240 = vweird.f32 %v1234
        %vm1241 = vmor %vm1239, %vm1240
        %v1242 = vsel %vm1241, %v1234, %v1238
        %v1243 = vand.u32 2147483647, %v1023
        %vm1244 = vcmp.eq.f32.partialorder %v1243, 8.507059e+37
        %v1245 = vand.u32 %v1023, 2147483648
        %v1246 = vor.u32 1.1754944e-38, %v1245
        %v1247 = vsel %vm1244, %v1246, %v1242
        %v1248 = vmul.f32 %v913, %v1037
        %v1249 = vmul.f32 %v915, %v1037
        %v1250 = vmul.f32 %v917, %v1051
        %v1251 = vmul.f32 %v919, %v1051
        %v1252 = vmul.f32 %v921, %v1065
        %v1253 = vmul.f32 %v923, %v1065
        %v1254 = vmul.f32 %v925, %v1079
        %v1255 = vmul.f32 %v927, %v1079
        %v1256 = vmul.f32 %v929, %v1093
        %v1257 = vmul.f32 %v931, %v1093
        %v1258 = vmul.f32 %v933, %v1107
        %v1259 = vmul.f32 %v935, %v1107
        %v1260 = vmul.f32 %v937, %v1121
        %v1261 = vmul.f32 %v939, %v1121
        %v1262 = vmul.f32 %v941, %v1135
        %v1263 = vmul.f32 %v943, %v1135
        %v1264 = vmul.f32 %v945, %v1149
        %v1265 = vmul.f32 %v947, %v1149
        %v1266 = vmul.f32 %v949, %v1163
        %v1267 = vmul.f32 %v951, %v1163
        %v1268 = vmul.f32 %v953, %v1177
        %v1269 = vmul.f32 %v955, %v1177
        %v1270 = vmul.f32 %v957, %v1191
        %v1271 = vmul.f32 %v959, %v1191
        %v1272 = vmul.f32 %v961, %v1205
        %v1273 = vmul.f32 %v963, %v1205
        %v1274 = vmul.f32 %v965, %v1219
        %v1275 = vmul.f32 %v967, %v1219
        %v1276 = vmul.f32 %v969, %v1233
        %v1277 = vmul.f32 %v971, %v1233
        %v1278 = vmul.f32 %v973, %v1247
        %v1279 = vmul.f32 %v975, %v1247
        %1280 = vst [vmem:[%s242] sm:$0xff] %v1248
        %1281 = vst [vmem:[%s242 + $0x8] sm:$0xff] %v1249
        %1282 = vst [vmem:[%s242 + $0x10] sm:$0xff] %v1250
        %1283 = vst [vmem:[%s242 + $0x18] sm:$0xff] %v1251
        %1284 = vst [vmem:[%s242 + $0x20] sm:$0xff] %v1252
        %1285 = vst [vmem:[%s242 + $0x28] sm:$0xff] %v1253
        %1286 = vst [vmem:[%s242 + $0x30] sm:$0xff] %v1254
        %1287 = vst [vmem:[%s242 + $0x38] sm:$0xff] %v1255
        %1288 = vst [vmem:[%s242 + $0x40] sm:$0xff] %v1256
        %1289 = vst [vmem:[%s242 + $0x48] sm:$0xff] %v1257
        %1290 = vst [vmem:[%s242 + $0x50] sm:$0xff] %v1258
        %1291 = vst [vmem:[%s242 + $0x58] sm:$0xff] %v1259
        %1292 = vst [vmem:[%s242 + $0x60] sm:$0xff] %v1260
        %1293 = vst [vmem:[%s242 + $0x68] sm:$0xff] %v1261
        %1294 = vst [vmem:[%s242 + $0x70] sm:$0xff] %v1262
        %1295 = vst [vmem:[%s242 + $0x78] sm:$0xff] %v1263
        %1296 = vst [vmem:[%s242 + $0x80] sm:$0xff] %v1264
        %1297 = vst [vmem:[%s242 + $0x88] sm:$0xff] %v1265
        %1298 = vst [vmem:[%s242 + $0x90] sm:$0xff] %v1266
        %1299 = vst [vmem:[%s242 + $0x98] sm:$0xff] %v1267
        %1300 = vst [vmem:[%s242 + $0xa0] sm:$0xff] %v1268
        %1301 = vst [vmem:[%s242 + $0xa8] sm:$0xff] %v1269
        %1302 = vst [vmem:[%s242 + $0xb0] sm:$0xff] %v1270
        %1303 = vst [vmem:[%s242 + $0xb8] sm:$0xff] %v1271
        %1304 = vst [vmem:[%s242 + $0xc0] sm:$0xff] %v1272
        %1305 = vst [vmem:[%s242 + $0xc8] sm:$0xff] %v1273
        %1306 = vst [vmem:[%s242 + $0xd0] sm:$0xff] %v1274
        %1307 = vst [vmem:[%s242 + $0xd8] sm:$0xff] %v1275
        %1308 = vst [vmem:[%s242 + $0xe0] sm:$0xff] %v1276
        %1309 = vst [vmem:[%s242 + $0xe8] sm:$0xff] %v1277
        %1310 = vst [vmem:[%s242 + $0xf0] sm:$0xff] %v1278
        %1311 = vst [vmem:[%s242 + $0xf8] sm:$0xff] %v1279
        %1312 = vrot.lane.b32.xlu0 %v398, 126
        %v1313 = vpop.permute.xlu0 %1312
        %1314 = vrot.lane.b32.xlu0 %v401, 126
        %v1315 = vpop.permute.xlu0 %1314
        %1316 = vrot.lane.b32.xlu0 %v404, 126
        %v1317 = vpop.permute.xlu0 %1316
        %1318 = vrot.lane.b32.xlu0 %v407, 126
        %v1319 = vpop.permute.xlu0 %1318
        %1320 = vrot.lane.b32.xlu0 %v410, 126
        %v1321 = vpop.permute.xlu0 %1320
        %1322 = vrot.lane.b32.xlu0 %v413, 126
        %v1323 = vpop.permute.xlu0 %1322
        %1324 = vrot.lane.b32.xlu0 %v416, 126
        %v1325 = vpop.permute.xlu0 %1324
        %1326 = vrot.lane.b32.xlu0 %v419, 126
        %v1327 = vpop.permute.xlu0 %1326
        %1328 = vrot.lane.b32.xlu0 %v422, 126
        %v1329 = vpop.permute.xlu0 %1328
        %1330 = vrot.lane.b32.xlu0 %v425, 126
        %v1331 = vpop.permute.xlu0 %1330
        %1332 = vrot.lane.b32.xlu0 %v428, 126
        %v1333 = vpop.permute.xlu0 %1332
        %1334 = vrot.lane.b32.xlu0 %v431, 126
        %v1335 = vpop.permute.xlu0 %1334
        %1336 = vrot.lane.b32.xlu0 %v434, 126
        %v1337 = vpop.permute.xlu0 %1336
        %1338 = vrot.lane.b32.xlu0 %v437, 126
        %v1339 = vpop.permute.xlu0 %1338
        %1340 = vrot.lane.b32.xlu0 %v440, 126
        %v1341 = vpop.permute.xlu0 %1340
        %1342 = vrot.lane.b32.xlu0 %v443, 126
        %v1343 = vpop.permute.xlu0 %1342
        %1344 = vrot.lane.b32.xlu0 %v446, 126
        %v1345 = vpop.permute.xlu0 %1344
        %1346 = vrot.lane.b32.xlu0 %v449, 126
        %v1347 = vpop.permute.xlu0 %1346
        %1348 = vrot.lane.b32.xlu0 %v452, 126
        %v1349 = vpop.permute.xlu0 %1348
        %1350 = vrot.lane.b32.xlu0 %v455, 126
        %v1351 = vpop.permute.xlu0 %1350
        %1352 = vrot.lane.b32.xlu0 %v458, 126
        %v1353 = vpop.permute.xlu0 %1352
        %1354 = vrot.lane.b32.xlu0 %v461, 126
        %v1355 = vpop.permute.xlu0 %1354
        %1356 = vrot.lane.b32.xlu0 %v464, 126
        %v1357 = vpop.permute.xlu0 %1356
        %1358 = vrot.lane.b32.xlu0 %v467, 126
        %v1359 = vpop.permute.xlu0 %1358
        %1360 = vrot.lane.b32.xlu0 %v470, 126
        %v1361 = vpop.permute.xlu0 %1360
        %1362 = vrot.lane.b32.xlu0 %v473, 126
        %v1363 = vpop.permute.xlu0 %1362
        %1364 = vrot.lane.b32.xlu0 %v476, 126
        %v1365 = vpop.permute.xlu0 %1364
        %1366 = vrot.lane.b32.xlu0 %v479, 126
        %v1367 = vpop.permute.xlu0 %1366
        %1368 = vrot.lane.b32.xlu0 %v482, 126
        %v1369 = vpop.permute.xlu0 %1368
        %1370 = vrot.lane.b32.xlu0 %v485, 126
        %v1371 = vpop.permute.xlu0 %1370
        %1372 = vrot.lane.b32.xlu0 %v488, 126
        %v1373 = vpop.permute.xlu0 %1372
        %1374 = vrot.lane.b32.xlu0 %v491, 126
        %v1375 = vpop.permute.xlu0 %1374
        %1408 = vmatpush.msra.mxu0 %v1343
        %1409 = vmatpush.msra.mxu0 %v1341
        %1410 = vmatpush.msra.mxu0 %v1339
        %1411 = vmatpush.msra.mxu0 %v1337
        %1412 = vmatpush.msra.mxu0 %v1335
        %1413 = vmatpush.msra.mxu0 %v1333
        %1414 = vmatpush.msra.mxu0 %v1331
        %1415 = vmatpush.msra.mxu0 %v1329
        %1416 = vmatpush.msra.mxu0 %v1327
        %1417 = vmatpush.msra.mxu0 %v1325
        %1418 = vmatpush.msra.mxu0 %v1323
        %1419 = vmatpush.msra.mxu0 %v1321
        %1420 = vmatpush.msra.mxu0 %v1319
        %1421 = vmatpush.msra.mxu0 %v1317
        %1422 = vmatpush.msra.mxu0 %v1315
        %1423 = vmatpush.msra.mxu0 %v1313
        %1424 = vmatmul.f32.gmra.mxu0 %v1248
        %v1425 = vpop.f32.mrf.mxu0
        %v1426 = vadd.f32 0.0, %v1425
        %1427 = vmatmul.f32.gmra.mxu0 %v1250
        %v1428 = vpop.f32.mrf.mxu0
        %v1429 = vadd.f32 0.0, %v1428
        %1430 = vmatmul.f32.gmra.mxu0 %v1252
        %v1431 = vpop.f32.mrf.mxu0
        %v1432 = vadd.f32 0.0, %v1431
        %1433 = vmatmul.f32.gmra.mxu0 %v1254
        %v1434 = vpop.f32.mrf.mxu0
        %v1435 = vadd.f32 0.0, %v1434
        %1436 = vmatmul.f32.gmra.mxu0 %v1256
        %v1437 = vpop.f32.mrf.mxu0
        %v1438 = vadd.f32 0.0, %v1437
        %1439 = vmatmul.f32.gmra.mxu0 %v1258
        %v1440 = vpop.f32.mrf.mxu0
        %v1441 = vadd.f32 0.0, %v1440
        %1442 = vmatmul.f32.gmra.mxu0 %v1260
        %v1443 = vpop.f32.mrf.mxu0
        %v1444 = vadd.f32 0.0, %v1443
        %1445 = vmatmul.f32.gmra.mxu0 %v1262
        %v1446 = vpop.f32.mrf.mxu0
        %v1447 = vadd.f32 0.0, %v1446
        %1448 = vmatmul.f32.gmra.mxu0 %v1264
        %v1449 = vpop.f32.mrf.mxu0
        %v1450 = vadd.f32 0.0, %v1449
        %1451 = vmatmul.f32.gmra.mxu0 %v1266
        %v1452 = vpop.f32.mrf.mxu0
        %v1453 = vadd.f32 0.0, %v1452
        %1454 = vmatmul.f32.gmra.mxu0 %v1268
        %v1455 = vpop.f32.mrf.mxu0
        %v1456 = vadd.f32 0.0, %v1455
        %1457 = vmatmul.f32.gmra.mxu0 %v1270
        %v1458 = vpop.f32.mrf.mxu0
        %v1459 = vadd.f32 0.0, %v1458
        %1460 = vmatmul.f32.gmra.mxu0 %v1272
        %v1461 = vpop.f32.mrf.mxu0
        %v1462 = vadd.f32 0.0, %v1461
        %1463 = vmatmul.f32.gmra.mxu0 %v1274
        %v1464 = vpop.f32.mrf.mxu0
        %v1465 = vadd.f32 0.0, %v1464
        %1466 = vmatmul.f32.gmra.mxu0 %v1276
        %v1467 = vpop.f32.mrf.mxu0
        %v1468 = vadd.f32 0.0, %v1467
        %1469 = vmatmul.f32.gmra.mxu0 %v1278
        %v1470 = vpop.f32.mrf.mxu0
        %v1471 = vadd.f32 0.0, %v1470
        %1472 = vdwg.mxu0
        %1473 = vmatpush.msra.mxu0 %v1375
        %1474 = vmatpush.msra.mxu0 %v1373
        %1475 = vmatpush.msra.mxu0 %v1371
        %1476 = vmatpush.msra.mxu0 %v1369
        %1477 = vmatpush.msra.mxu0 %v1367
        %1478 = vmatpush.msra.mxu0 %v1365
        %1479 = vmatpush.msra.mxu0 %v1363
        %1480 = vmatpush.msra.mxu0 %v1361
        %1481 = vmatpush.msra.mxu0 %v1359
        %1482 = vmatpush.msra.mxu0 %v1357
        %1483 = vmatpush.msra.mxu0 %v1355
        %1484 = vmatpush.msra.mxu0 %v1353
        %1485 = vmatpush.msra.mxu0 %v1351
        %1486 = vmatpush.msra.mxu0 %v1349
        %1487 = vmatpush.msra.mxu0 %v1347
        %1488 = vmatpush.msra.mxu0 %v1345
        %1489 = vmatmul.f32.gmra.mxu0 %v1249
        %v1490 = vpop.f32.mrf.mxu0
        %v1491 = vadd.f32 %v1426, %v1490
        %1492 = vmatmul.f32.gmra.mxu0 %v1251
        %v1493 = vpop.f32.mrf.mxu0
        %v1494 = vadd.f32 %v1429, %v1493
        %1495 = vmatmul.f32.gmra.mxu0 %v1253
        %v1496 = vpop.f32.mrf.mxu0
        %v1497 = vadd.f32 %v1432, %v1496
        %1498 = vmatmul.f32.gmra.mxu0 %v1255
        %v1499 = vpop.f32.mrf.mxu0
        %v1500 = vadd.f32 %v1435, %v1499
        %1501 = vmatmul.f32.gmra.mxu0 %v1257
        %v1502 = vpop.f32.mrf.mxu0
        %v1503 = vadd.f32 %v1438, %v1502
        %1504 = vmatmul.f32.gmra.mxu0 %v1259
        %v1505 = vpop.f32.mrf.mxu0
        %v1506 = vadd.f32 %v1441, %v1505
        %1507 = vmatmul.f32.gmra.mxu0 %v1261
        %v1508 = vpop.f32.mrf.mxu0
        %v1509 = vadd.f32 %v1444, %v1508
        %1510 = vmatmul.f32.gmra.mxu0 %v1263
        %v1511 = vpop.f32.mrf.mxu0
        %v1512 = vadd.f32 %v1447, %v1511
        %1513 = vmatmul.f32.gmra.mxu0 %v1265
        %v1514 = vpop.f32.mrf.mxu0
        %v1515 = vadd.f32 %v1450, %v1514
        %1516 = vmatmul.f32.gmra.mxu0 %v1267
        %v1517 = vpop.f32.mrf.mxu0
        %v1518 = vadd.f32 %v1453, %v1517
        %1519 = vmatmul.f32.gmra.mxu0 %v1269
        %v1520 = vpop.f32.mrf.mxu0
        %v1521 = vadd.f32 %v1456, %v1520
        %1522 = vmatmul.f32.gmra.mxu0 %v1271
        %v1523 = vpop.f32.mrf.mxu0
        %v1524 = vadd.f32 %v1459, %v1523
        %1525 = vmatmul.f32.gmra.mxu0 %v1273
        %v1526 = vpop.f32.mrf.mxu0
        %v1527 = vadd.f32 %v1462, %v1526
        %1528 = vmatmul.f32.gmra.mxu0 %v1275
        %v1529 = vpop.f32.mrf.mxu0
        %v1530 = vadd.f32 %v1465, %v1529
        %1531 = vmatmul.f32.gmra.mxu0 %v1277
        %v1532 = vpop.f32.mrf.mxu0
        %v1533 = vadd.f32 %v1468, %v1532
        %1534 = vmatmul.f32.gmra.mxu0 %v1279
        %v1535 = vpop.f32.mrf.mxu0
        %v1536 = vadd.f32 %v1471, %v1535
        %1537 = vdwg.mxu0
        %1538 = vst.msk [vmem:[%s248] sm:$0xff] %vm589, %v1491
        %1539 = vst.msk [vmem:[%s248 + $0x8] sm:$0xff] %vm589, %v1494
        %1540 = vst.msk [vmem:[%s248 + $0x10] sm:$0xff] %vm589, %v1497
        %1541 = vst.msk [vmem:[%s248 + $0x18] sm:$0xff] %vm589, %v1500
        %1542 = vst.msk [vmem:[%s248 + $0x20] sm:$0xff] %vm589, %v1503
        %1543 = vst.msk [vmem:[%s248 + $0x28] sm:$0xff] %vm589, %v1506
        %1544 = vst.msk [vmem:[%s248 + $0x30] sm:$0xff] %vm589, %v1509
        %1545 = vst.msk [vmem:[%s248 + $0x38] sm:$0xff] %vm589, %v1512
        %1546 = vst.msk [vmem:[%s248 + $0x40] sm:$0xff] %vm589, %v1515
        %1547 = vst.msk [vmem:[%s248 + $0x48] sm:$0xff] %vm589, %v1518
        %1548 = vst.msk [vmem:[%s248 + $0x50] sm:$0xff] %vm589, %v1521
        %1549 = vst.msk [vmem:[%s248 + $0x58] sm:$0xff] %vm589, %v1524
        %1550 = vst.msk [vmem:[%s248 + $0x60] sm:$0xff] %vm589, %v1527
        %1551 = vst.msk [vmem:[%s248 + $0x68] sm:$0xff] %vm589, %v1530
        %1552 = vst.msk [vmem:[%s248 + $0x70] sm:$0xff] %vm589, %v1533
        %1553 = vst.msk [vmem:[%s248 + $0x78] sm:$0xff] %vm589, %v1536
        %s1554 = smul.u32 16, %s23
        %p1555 = scmp.lt.s32.totalorder %s1554, 31
        %s1556 = scalar_select %p1555, %s1554, 31
        %s1557 = smul.addr %s1556, 8
        %s1558 = scalar_lea.vmem %s3, %s1557
        %s1559 = sand.u32 %s125, 1
        %s1560 = scalar_lea.sflag [#allocation4], %s1559
        %s1561 = sand.u32 %s125, 1
        %s1562 = smul.addr %s1561, 256
        %s1563 = scalar_lea.vmem [#allocation7], %s1562
        // Predicated region
        $region41: #{tpu_custom_call.1} parent=31 // pred_check
          %p1564 = pneg %p109
        $region42: #{tpu_custom_call.1} parent=31 // pred_check_branch
          %1566 = sbr.rel (%p1564) target = $region44
        $region43: #{tpu_custom_call.1} parent=31 // pred_region
          %s1567 = smul.u32 16, %s23
        $region44: #{tpu_custom_call.1} parent=31 // pred_fallthru
          _
        // Predicated region
        $region45: #{tpu_custom_call.1} parent=31 // pred_check
          %p1568 = pneg %p135
        $region46: #{tpu_custom_call.1} parent=31 // pred_check_branch
          %1570 = sbr.rel (%p1568) target = $region48
        $region47: #{tpu_custom_call.1} parent=31 // pred_region
          %s1571 = smul.u32 16, %s23
          %1573 = vsyncadd %s1560, 0
          %s1574 = smul.addr %s1571, 2
          %s1575 = smul.addr %s1574, 8
          %s1576 = scalar_lea.hbm %s4, %s1575
          %s1577 = sshll.u32 %s1563, 4
          %s1578 = int_to_ptr.vmem [resolvable:$true] %s1577
          %s1579 = sshll.u32 %s1576, 4
          %s1580 = int_to_ptr.hbm [resolvable:$true] %s1579
          %1585 = dma.vmem_to_hbm [thread:$0]  %s1578, 4096, %s1580, %s1560, 256, 256, 16
        $region48: #{tpu_custom_call.1} parent=31 // pred_fallthru
          _
      $region32: #{tpu_custom_call.1} parent=5 // pred_fallthru
        _
      %p1586 = scmp.le.s32.totalorder 2, %s18
      // Predicated region
      $region49: #{tpu_custom_call.1} parent=5 // pred_check
        %p1587 = pneg %p1586
      $region50: #{tpu_custom_call.1} parent=5 // pred_check_branch
        %1589 = sbr.rel (%p1587) target = $region52
      $region51: #{tpu_custom_call.1} parent=5 // pred_region
        %s1590 = ssub.s32 %s18, 2
        // Predicated region
        $region53: #{tpu_custom_call.1} parent=51 // pred_check
          %p1591 = pneg %p115
        $region54: #{tpu_custom_call.1} parent=51 // pred_check_branch
          %1593 = sbr.rel (%p1591) target = $region56
        $region55: #{tpu_custom_call.1} parent=51 // pred_region
          %s1594 = smul.u32 16, %s24
          %p1595 = scmp.lt.s32.totalorder %s1594, 31
          %s1596 = scalar_select %p1595, %s1594, 31
          %s1597 = smul.addr %s1596, 8
          %s1598 = scalar_lea.vmem %s3, %s1597
        $region56: #{tpu_custom_call.1} parent=51 // pred_fallthru
          _
        // Predicated region
        $region57: #{tpu_custom_call.1} parent=51 // pred_check
          %p1599 = pneg %p141
        $region58: #{tpu_custom_call.1} parent=51 // pred_check_branch
          %1601 = sbr.rel (%p1599) target = $region60
        $region59: #{tpu_custom_call.1} parent=51 // pred_region
          %s1602 = sand.u32 %s126, 1
          %s1603 = scalar_lea.sflag [#allocation4], %s1602
          %s1604 = sand.u32 %s126, 1
          %s1605 = smul.addr %s1604, 256
          %s1606 = scalar_lea.vmem [#allocation7], %s1605
          %1608 = dma.done %s1603, 4096
        $region60: #{tpu_custom_call.1} parent=51 // pred_fallthru
          _
      $region52: #{tpu_custom_call.1} parent=5 // pred_fallthru
        _
    $region6: #{tpu_custom_call.1} parent=1 // loop_footer
      %s22 = sadd.s32 1, %s18
    $region7: #{tpu_custom_call.1} parent=1 // loop_footer_branch
      %17 = sbr.rel target = $region3
    $region8: #{tpu_custom_call.1} parent=1 // loop_exit
      _
    %1609 = vsyncpa [#allocation3], 1
    %s1610 = scalar_lea.sflag [#allocation3], 1
    %1611 = vsyncpa %s1610, 1
    %1612 = vsyncpa [#allocation6], 1
    %1613 = vsyncpa [#allocation4], 1
    %s1614 = scalar_lea.sflag [#allocation4], 1
    %1615 = vsyncpa %s1614, 1

</llo_original>
